<compile_context>
chip_gen: v5e
topology: v5e:2x2
jax: 0.10.0
libtpu: 0.0.40
codegen_flags: <defaults>
</compile_context>

<pallas_src>
import functools

import numpy as np
import jax
import jax.numpy as jnp
from jax import lax
from jax.experimental import pallas as pl
from jax.experimental.pallas import tpu as pltpu


# ----------------------------------------------------------------------------
# Pallas kernel
# ----------------------------------------------------------------------------
def _conv3d_relu_res_kernel(xp_ref, xr_ref, w_ref, o_ref, acc_ref, *, D, H, kd, kh):
    # xp_ref : (1, D+2*pd, H+2*ph, W*C)  bf16, D/H zero-padded, (W,C) lane-fused
    # xr_ref : (1, D*H, W*C)             f32 residual (un-padded, lane-dense)
    # w_ref  : (kd*kh, W*C, W*C)         bf16 block-banded weights (W pad folded in)
    # o_ref  : (1, D*H, W*C)             f32 lane-dense output
    # acc_ref: (D*H, W*C)                f32 VMEM scratch accumulator
    DH = D * H
    N = o_ref.shape[-1]

    acc_ref[...] = jnp.zeros_like(acc_ref)
    for i in range(kd):
        for j in range(kh):
            xs = xp_ref[0, i:i + D, j:j + H, :].reshape(DH, N)
            acc_ref[...] += jnp.dot(xs, w_ref[i * kh + j],
                                    preferred_element_type=jnp.float32)

    # ReLU then residual add (exact f32 x), single full-width lane-dense store.
    o_ref[0] = jnp.maximum(acc_ref[...], 0.0) + xr_ref[0]


# ----------------------------------------------------------------------------
# Host-side weight repacking (concrete weights only; done once per layer)
# ----------------------------------------------------------------------------
def _pack_weights(w, W, pw):
    """Fold the kw taps + Cin contraction + W zero-padding into per-(kd,kh)
    block-banded matrices of shape (W*Cin, W*Cout)."""
    w = np.asarray(w, np.float32)                  # (Cout, Cin, kd, kh, kw)
    Cout, Cin, kd, kh, kw = w.shape
    wb = np.zeros((kd * kh, W * Cin, W * Cout), np.float32)
    for i in range(kd):
        for j in range(kh):
            t = i * kh + j
            for k in range(kw):
                blk = w[:, :, i, j, k].T           # (Cin, Cout)
                for ww in range(W):
                    src = ww + k - pw              # un-padded W source index
                    if 0 <= src < W:               # zero-padding taps -> omitted
                        wb[t, src * Cin:(src + 1) * Cin,
                              ww * Cout:(ww + 1) * Cout] = blk
    return wb


# ----------------------------------------------------------------------------
# Pallas wrapper
# ----------------------------------------------------------------------------
@functools.partial(jax.jit, static_argnames=("ksize", "pad"))
def _basic_conv3d_call(x, wb, ksize, pad):
    B, C, D, H, W = x.shape
    kd, kh, kw = ksize
    pd, ph, pw = pad
    Dp, Hp = D + 2 * pd, H + 2 * ph
    N = W * C

    # NCDHW -> NDHWC once; residual stays f32 lane-dense; conv path goes bf16,
    # zero-padded only along D/H (W padding lives in the banded weights).
    xt = jnp.transpose(x, (0, 2, 3, 4, 1))                      # (B,D,H,W,C) f32
    x_res = xt.reshape(B, D * H, N)                             # f32 residual
    x_pad = jnp.pad(xt.astype(jnp.bfloat16),
                    ((0, 0), (pd, pd), (ph, ph), (0, 0), (0, 0))
                    ).reshape(B, Dp, Hp, N)                     # bf16 conv input

    kern = functools.partial(_conv3d_relu_res_kernel, D=D, H=H, kd=kd, kh=kh)
    out = pl.pallas_call(
        kern,
        out_shape=jax.ShapeDtypeStruct((B, D * H, N), jnp.float32),
        grid=(B,),
        in_specs=[
            pl.BlockSpec((1, Dp, Hp, N), lambda b: (b, 0, 0, 0)),
            pl.BlockSpec((1, D * H, N), lambda b: (b, 0, 0)),
            pl.BlockSpec(wb.shape, lambda b: (0, 0, 0)),
        ],
        out_specs=pl.BlockSpec((1, D * H, N), lambda b: (b, 0, 0)),
        scratch_shapes=[pltpu.VMEM((D * H, N), jnp.float32)],
        compiler_params=pltpu.CompilerParams(dimension_semantics=("parallel",)),
    )(x_pad, x_res, wb)

    # (B, D*H, W*C) -> (B, C, D, H, W)
    return jnp.transpose(out.reshape(B, D, H, W, C), (0, 4, 1, 2, 3))


def make_basic_conv3d(w, padding):
    """Build BasicConv3d.forward: packs weights once, returns f(x)."""
    w_np = np.asarray(w, np.float32)
    Cout, Cin, kd, kh, kw = w_np.shape
    pd, ph, pw = padding
    if Cin != Cout:
        raise ValueError("residual `y + x` requires in_channel == out_channel")
    if (kd, kh, kw) != (2 * pd + 1, 2 * ph + 1, 2 * pw + 1):
        raise ValueError("residual `y + x` requires a shape-preserving conv "
                         "(stride 1, padding = (k-1)//2)")

    packed = {}  # per spatial width W (packing depends on W)

    def forward(x):
        B, C, D, H, W = x.shape
        if C != Cin:
            raise ValueError("channel mismatch")
        if W not in packed:
            packed[W] = jnp.asarray(_pack_weights(w_np, W, pw), jnp.bfloat16)
        return _basic_conv3d_call(x, packed[W], (kd, kh, kw), (pd, ph, pw))

    return forward


# ----------------------------------------------------------------------------
# Plain-JAX reference (correctness check)
# ----------------------------------------------------------------------------
def basic_conv3d_reference(x, w, padding):
    y = lax.conv_general_dilated(
        x, w, window_strides=(1, 1, 1),
        padding=[(p, p) for p in padding],
        dimension_numbers=("NCDHW", "OIDHW", "NCDHW"))
    return jax.nn.relu(y) + x


if __name__ == "__main__":
    B, C, D, H, W = 2, 8, 8, 16, 16           # W*C = 128, D*H = 128: lane-dense
    key = jax.random.PRNGKey(0)
    kx, kw1, kw2 = jax.random.split(key, 3)
    x = jax.random.normal(kx, (B, C, D, H, W), jnp.float32)

    configs = [
        ((3, 3, 3), (1, 1, 1), kw1),          # BasicConv3d(kernel=3, pad=1)
        ((1, 3, 3), (0, 1, 1), kw2),          # BasicConv3d(kernel=(1,3,3), pad=(0,1,1))
    ]
    for ksize, pad, kk in configs:
        fan_in = C * ksize[0] * ksize[1] * ksize[2]
        w = jax.random.normal(kk, (C, C) + ksize, jnp.float32) / np.sqrt(fan_in)

        conv = make_basic_conv3d(w, pad)      # weights packed once, here
        out = jax.block_until_ready(conv(x))
        ref = basic_conv3d_reference(x, w, pad)
        np.testing.assert_allclose(np.asarray(out), np.asarray(ref),
                                   rtol=5e-2, atol=5e-2)

    print("KERNEL_OK")
</pallas_src>

<mosaic_0001>
module attributes {stable_mosaic.version = 11 : i64} {
  func.func @_conv3d_relu_res_kernel(%arg0: i32, %arg1: memref<1x10x18x128xbf16, #tpu.memory_space<vmem>>, %arg2: memref<1x128x128xf32, #tpu.memory_space<vmem>>, %arg3: memref<9x128x128xbf16, #tpu.memory_space<vmem>>, %arg4: memref<1x128x128xf32, #tpu.memory_space<vmem>>, %arg5: memref<128x128xf32, #tpu.memory_space<vmem>>) attributes {dimension_semantics = [#tpu.dimension_semantics<parallel>], iteration_bounds = array<i64: 2>, scalar_prefetch = 0 : i64, scratch_operands = 1 : i64, tpu.core_type = #tpu.core_type<tc>, window_params = [{transform_indices = @transform_0, window_bounds = array<i64: 1, 10, 18, 128>}, {transform_indices = @transform_1, window_bounds = array<i64: 1, 128, 128>}, {pipeline_mode = #tpu.pipeline_mode<synchronous>, transform_indices = @transform_2, window_bounds = array<i64: 9, 128, 128>}, {transform_indices = @transform_3, window_bounds = array<i64: 1, 128, 128>}]} {
    %cst = arith.constant 0.000000e+00 : f32
    %0 = vector.broadcast %cst : f32 to vector<128x128xf32>
    %c0 = arith.constant 0 : index
    %c0_0 = arith.constant 0 : index
    %1 = vector.load %arg5[%c0, %c0_0] : memref<128x128xf32, #tpu.memory_space<vmem>>, vector<128x128xf32>
    tpu.vector_store %arg5[%c0, %c0_0], %0 {strides = array<i32>} : memref<128x128xf32, #tpu.memory_space<vmem>>, vector<128x128xf32>,
    %c0_1 = arith.constant 0 : index
    %c0_2 = arith.constant 0 : index
    %c0_3 = arith.constant 0 : index
    %c0_4 = arith.constant 0 : index
    %2 = vector.load %arg1[%c0_1, %c0_2, %c0_3, %c0_4] : memref<1x10x18x128xbf16, #tpu.memory_space<vmem>>, vector<1x8x16x128xbf16>
    %3 = vector.shape_cast %2 : vector<1x8x16x128xbf16> to vector<8x16x128xbf16>
    %4 = vector.shape_cast %3 : vector<8x16x128xbf16> to vector<128x128xbf16>
    %c0_5 = arith.constant 0 : index
    %c0_6 = arith.constant 0 : index
    %5 = vector.load %arg5[%c0_5, %c0_6] : memref<128x128xf32, #tpu.memory_space<vmem>>, vector<128x128xf32>
    %c0_7 = arith.constant 0 : index
    %c0_8 = arith.constant 0 : index
    %c0_9 = arith.constant 0 : index
    %6 = vector.load %arg3[%c0_7, %c0_8, %c0_9] : memref<9x128x128xbf16, #tpu.memory_space<vmem>>, vector<1x128x128xbf16>
    %7 = vector.shape_cast %6 : vector<1x128x128xbf16> to vector<128x128xbf16>
    %cst_10 = arith.constant dense<0.000000e+00> : vector<128x128xf32>
    %8 = tpu.matmul %4, %7, %cst_10 {dimension_numbers = #tpu.dot_dimension_numbers<[1], [0], [0], [1], [0, 0, 1, 1], [], []>} : vector<128x128xbf16>, vector<128x128xbf16>, vector<128x128xf32> -> vector<128x128xf32>
    %9 = arith.addf %5, %8 : vector<128x128xf32>
    %c0_11 = arith.constant 0 : index
    %c0_12 = arith.constant 0 : index
    %10 = vector.load %arg5[%c0_11, %c0_12] : memref<128x128xf32, #tpu.memory_space<vmem>>, vector<128x128xf32>
    tpu.vector_store %arg5[%c0_11, %c0_12], %9 {strides = array<i32>} : memref<128x128xf32, #tpu.memory_space<vmem>>, vector<128x128xf32>,
    %c0_13 = arith.constant 0 : index
    %c0_14 = arith.constant 0 : index
    %c1 = arith.constant 1 : index
    %c0_15 = arith.constant 0 : index
    %11 = vector.load %arg1[%c0_13, %c0_14, %c1, %c0_15] : memref<1x10x18x128xbf16, #tpu.memory_space<vmem>>, vector<1x8x16x128xbf16>
    %12 = vector.shape_cast %11 : vector<1x8x16x128xbf16> to vector<8x16x128xbf16>
    %13 = vector.shape_cast %12 : vector<8x16x128xbf16> to vector<128x128xbf16>
    %c0_16 = arith.constant 0 : index
    %c0_17 = arith.constant 0 : index
    %14 = vector.load %arg5[%c0_16, %c0_17] : memref<128x128xf32, #tpu.memory_space<vmem>>, vector<128x128xf32>
    %c1_18 = arith.constant 1 : index
    %c0_19 = arith.constant 0 : index
    %c0_20 = arith.constant 0 : index
    %15 = vector.load %arg3[%c1_18, %c0_19, %c0_20] : memref<9x128x128xbf16, #tpu.memory_space<vmem>>, vector<1x128x128xbf16>
    %16 = vector.shape_cast %15 : vector<1x128x128xbf16> to vector<128x128xbf16>
    %cst_21 = arith.constant dense<0.000000e+00> : vector<128x128xf32>
    %17 = tpu.matmul %13, %16, %cst_21 {dimension_numbers = #tpu.dot_dimension_numbers<[1], [0], [0], [1], [0, 0, 1, 1], [], []>} : vector<128x128xbf16>, vector<128x128xbf16>, vector<128x128xf32> -> vector<128x128xf32>
    %18 = arith.addf %14, %17 : vector<128x128xf32>
    %c0_22 = arith.constant 0 : index
    %c0_23 = arith.constant 0 : index
    %19 = vector.load %arg5[%c0_22, %c0_23] : memref<128x128xf32, #tpu.memory_space<vmem>>, vector<128x128xf32>
    tpu.vector_store %arg5[%c0_22, %c0_23], %18 {strides = array<i32>} : memref<128x128xf32, #tpu.memory_space<vmem>>, vector<128x128xf32>,
    %c0_24 = arith.constant 0 : index
    %c0_25 = arith.constant 0 : index
    %c2 = arith.constant 2 : index
    %c0_26 = arith.constant 0 : index
    %20 = vector.load %arg1[%c0_24, %c0_25, %c2, %c0_26] : memref<1x10x18x128xbf16, #tpu.memory_space<vmem>>, vector<1x8x16x128xbf16>
    %21 = vector.shape_cast %20 : vector<1x8x16x128xbf16> to vector<8x16x128xbf16>
    %22 = vector.shape_cast %21 : vector<8x16x128xbf16> to vector<128x128xbf16>
    %c0_27 = arith.constant 0 : index
    %c0_28 = arith.constant 0 : index
    %23 = vector.load %arg5[%c0_27, %c0_28] : memref<128x128xf32, #tpu.memory_space<vmem>>, vector<128x128xf32>
    %c2_29 = arith.constant 2 : index
    %c0_30 = arith.constant 0 : index
    %c0_31 = arith.constant 0 : index
    %24 = vector.load %arg3[%c2_29, %c0_30, %c0_31] : memref<9x128x128xbf16, #tpu.memory_space<vmem>>, vector<1x128x128xbf16>
    %25 = vector.shape_cast %24 : vector<1x128x128xbf16> to vector<128x128xbf16>
    %cst_32 = arith.constant dense<0.000000e+00> : vector<128x128xf32>
    %26 = tpu.matmul %22, %25, %cst_32 {dimension_numbers = #tpu.dot_dimension_numbers<[1], [0], [0], [1], [0, 0, 1, 1], [], []>} : vector<128x128xbf16>, vector<128x128xbf16>, vector<128x128xf32> -> vector<128x128xf32>
    %27 = arith.addf %23, %26 : vector<128x128xf32>
    %c0_33 = arith.constant 0 : index
    %c0_34 = arith.constant 0 : index
    %28 = vector.load %arg5[%c0_33, %c0_34] : memref<128x128xf32, #tpu.memory_space<vmem>>, vector<128x128xf32>
    tpu.vector_store %arg5[%c0_33, %c0_34], %27 {strides = array<i32>} : memref<128x128xf32, #tpu.memory_space<vmem>>, vector<128x128xf32>,
    %c0_35 = arith.constant 0 : index
    %c1_36 = arith.constant 1 : index
    %c0_37 = arith.constant 0 : index
    %c0_38 = arith.constant 0 : index
    %29 = vector.load %arg1[%c0_35, %c1_36, %c0_37, %c0_38] : memref<1x10x18x128xbf16, #tpu.memory_space<vmem>>, vector<1x8x16x128xbf16>
    %30 = vector.shape_cast %29 : vector<1x8x16x128xbf16> to vector<8x16x128xbf16>
    %31 = vector.shape_cast %30 : vector<8x16x128xbf16> to vector<128x128xbf16>
    %c0_39 = arith.constant 0 : index
    %c0_40 = arith.constant 0 : index
    %32 = vector.load %arg5[%c0_39, %c0_40] : memref<128x128xf32, #tpu.memory_space<vmem>>, vector<128x128xf32>
    %c3 = arith.constant 3 : index
    %c0_41 = arith.constant 0 : index
    %c0_42 = arith.constant 0 : index
    %33 = vector.load %arg3[%c3, %c0_41, %c0_42] : memref<9x128x128xbf16, #tpu.memory_space<vmem>>, vector<1x128x128xbf16>
    %34 = vector.shape_cast %33 : vector<1x128x128xbf16> to vector<128x128xbf16>
    %cst_43 = arith.constant dense<0.000000e+00> : vector<128x128xf32>
    %35 = tpu.matmul %31, %34, %cst_43 {dimension_numbers = #tpu.dot_dimension_numbers<[1], [0], [0], [1], [0, 0, 1, 1], [], []>} : vector<128x128xbf16>, vector<128x128xbf16>, vector<128x128xf32> -> vector<128x128xf32>
    %36 = arith.addf %32, %35 : vector<128x128xf32>
    %c0_44 = arith.constant 0 : index
    %c0_45 = arith.constant 0 : index
    %37 = vector.load %arg5[%c0_44, %c0_45] : memref<128x128xf32, #tpu.memory_space<vmem>>, vector<128x128xf32>
    tpu.vector_store %arg5[%c0_44, %c0_45], %36 {strides = array<i32>} : memref<128x128xf32, #tpu.memory_space<vmem>>, vector<128x128xf32>,
    %c0_46 = arith.constant 0 : index
    %c1_47 = arith.constant 1 : index
    %c1_48 = arith.constant 1 : index
    %c0_49 = arith.constant 0 : index
    %38 = vector.load %arg1[%c0_46, %c1_47, %c1_48, %c0_49] : memref<1x10x18x128xbf16, #tpu.memory_space<vmem>>, vector<1x8x16x128xbf16>
    %39 = vector.shape_cast %38 : vector<1x8x16x128xbf16> to vector<8x16x128xbf16>
    %40 = vector.shape_cast %39 : vector<8x16x128xbf16> to vector<128x128xbf16>
    %c0_50 = arith.constant 0 : index
    %c0_51 = arith.constant 0 : index
    %41 = vector.load %arg5[%c0_50, %c0_51] : memref<128x128xf32, #tpu.memory_space<vmem>>, vector<128x128xf32>
    %c4 = arith.constant 4 : index
    %c0_52 = arith.constant 0 : index
    %c0_53 = arith.constant 0 : index
    %42 = vector.load %arg3[%c4, %c0_52, %c0_53] : memref<9x128x128xbf16, #tpu.memory_space<vmem>>, vector<1x128x128xbf16>
    %43 = vector.shape_cast %42 : vector<1x128x128xbf16> to vector<128x128xbf16>
    %cst_54 = arith.constant dense<0.000000e+00> : vector<128x128xf32>
    %44 = tpu.matmul %40, %43, %cst_54 {dimension_numbers = #tpu.dot_dimension_numbers<[1], [0], [0], [1], [0, 0, 1, 1], [], []>} : vector<128x128xbf16>, vector<128x128xbf16>, vector<128x128xf32> -> vector<128x128xf32>
    %45 = arith.addf %41, %44 : vector<128x128xf32>
    %c0_55 = arith.constant 0 : index
    %c0_56 = arith.constant 0 : index
    %46 = vector.load %arg5[%c0_55, %c0_56] : memref<128x128xf32, #tpu.memory_space<vmem>>, vector<128x128xf32>
    tpu.vector_store %arg5[%c0_55, %c0_56], %45 {strides = array<i32>} : memref<128x128xf32, #tpu.memory_space<vmem>>, vector<128x128xf32>,
    %c0_57 = arith.constant 0 : index
    %c1_58 = arith.constant 1 : index
    %c2_59 = arith.constant 2 : index
    %c0_60 = arith.constant 0 : index
    %47 = vector.load %arg1[%c0_57, %c1_58, %c2_59, %c0_60] : memref<1x10x18x128xbf16, #tpu.memory_space<vmem>>, vector<1x8x16x128xbf16>
    %48 = vector.shape_cast %47 : vector<1x8x16x128xbf16> to vector<8x16x128xbf16>
    %49 = vector.shape_cast %48 : vector<8x16x128xbf16> to vector<128x128xbf16>
    %c0_61 = arith.constant 0 : index
    %c0_62 = arith.constant 0 : index
    %50 = vector.load %arg5[%c0_61, %c0_62] : memref<128x128xf32, #tpu.memory_space<vmem>>, vector<128x128xf32>
    %c5 = arith.constant 5 : index
    %c0_63 = arith.constant 0 : index
    %c0_64 = arith.constant 0 : index
    %51 = vector.load %arg3[%c5, %c0_63, %c0_64] : memref<9x128x128xbf16, #tpu.memory_space<vmem>>, vector<1x128x128xbf16>
    %52 = vector.shape_cast %51 : vector<1x128x128xbf16> to vector<128x128xbf16>
    %cst_65 = arith.constant dense<0.000000e+00> : vector<128x128xf32>
    %53 = tpu.matmul %49, %52, %cst_65 {dimension_numbers = #tpu.dot_dimension_numbers<[1], [0], [0], [1], [0, 0, 1, 1], [], []>} : vector<128x128xbf16>, vector<128x128xbf16>, vector<128x128xf32> -> vector<128x128xf32>
    %54 = arith.addf %50, %53 : vector<128x128xf32>
    %c0_66 = arith.constant 0 : index
    %c0_67 = arith.constant 0 : index
    %55 = vector.load %arg5[%c0_66, %c0_67] : memref<128x128xf32, #tpu.memory_space<vmem>>, vector<128x128xf32>
    tpu.vector_store %arg5[%c0_66, %c0_67], %54 {strides = array<i32>} : memref<128x128xf32, #tpu.memory_space<vmem>>, vector<128x128xf32>,
    %c0_68 = arith.constant 0 : index
    %c2_69 = arith.constant 2 : index
    %c0_70 = arith.constant 0 : index
    %c0_71 = arith.constant 0 : index
    %56 = vector.load %arg1[%c0_68, %c2_69, %c0_70, %c0_71] : memref<1x10x18x128xbf16, #tpu.memory_space<vmem>>, vector<1x8x16x128xbf16>
    %57 = vector.shape_cast %56 : vector<1x8x16x128xbf16> to vector<8x16x128xbf16>
    %58 = vector.shape_cast %57 : vector<8x16x128xbf16> to vector<128x128xbf16>
    %c0_72 = arith.constant 0 : index
    %c0_73 = arith.constant 0 : index
    %59 = vector.load %arg5[%c0_72, %c0_73] : memref<128x128xf32, #tpu.memory_space<vmem>>, vector<128x128xf32>
    %c6 = arith.constant 6 : index
    %c0_74 = arith.constant 0 : index
    %c0_75 = arith.constant 0 : index
    %60 = vector.load %arg3[%c6, %c0_74, %c0_75] : memref<9x128x128xbf16, #tpu.memory_space<vmem>>, vector<1x128x128xbf16>
    %61 = vector.shape_cast %60 : vector<1x128x128xbf16> to vector<128x128xbf16>
    %cst_76 = arith.constant dense<0.000000e+00> : vector<128x128xf32>
    %62 = tpu.matmul %58, %61, %cst_76 {dimension_numbers = #tpu.dot_dimension_numbers<[1], [0], [0], [1], [0, 0, 1, 1], [], []>} : vector<128x128xbf16>, vector<128x128xbf16>, vector<128x128xf32> -> vector<128x128xf32>
    %63 = arith.addf %59, %62 : vector<128x128xf32>
    %c0_77 = arith.constant 0 : index
    %c0_78 = arith.constant 0 : index
    %64 = vector.load %arg5[%c0_77, %c0_78] : memref<128x128xf32, #tpu.memory_space<vmem>>, vector<128x128xf32>
    tpu.vector_store %arg5[%c0_77, %c0_78], %63 {strides = array<i32>} : memref<128x128xf32, #tpu.memory_space<vmem>>, vector<128x128xf32>,
    %c0_79 = arith.constant 0 : index
    %c2_80 = arith.constant 2 : index
    %c1_81 = arith.constant 1 : index
    %c0_82 = arith.constant 0 : index
    %65 = vector.load %arg1[%c0_79, %c2_80, %c1_81, %c0_82] : memref<1x10x18x128xbf16, #tpu.memory_space<vmem>>, vector<1x8x16x128xbf16>
    %66 = vector.shape_cast %65 : vector<1x8x16x128xbf16> to vector<8x16x128xbf16>
    %67 = vector.shape_cast %66 : vector<8x16x128xbf16> to vector<128x128xbf16>
    %c0_83 = arith.constant 0 : index
    %c0_84 = arith.constant 0 : index
    %68 = vector.load %arg5[%c0_83, %c0_84] : memref<128x128xf32, #tpu.memory_space<vmem>>, vector<128x128xf32>
    %c7 = arith.constant 7 : index
    %c0_85 = arith.constant 0 : index
    %c0_86 = arith.constant 0 : index
    %69 = vector.load %arg3[%c7, %c0_85, %c0_86] : memref<9x128x128xbf16, #tpu.memory_space<vmem>>, vector<1x128x128xbf16>
    %70 = vector.shape_cast %69 : vector<1x128x128xbf16> to vector<128x128xbf16>
    %cst_87 = arith.constant dense<0.000000e+00> : vector<128x128xf32>
    %71 = tpu.matmul %67, %70, %cst_87 {dimension_numbers = #tpu.dot_dimension_numbers<[1], [0], [0], [1], [0, 0, 1, 1], [], []>} : vector<128x128xbf16>, vector<128x128xbf16>, vector<128x128xf32> -> vector<128x128xf32>
    %72 = arith.addf %68, %71 : vector<128x128xf32>
    %c0_88 = arith.constant 0 : index
    %c0_89 = arith.constant 0 : index
    %73 = vector.load %arg5[%c0_88, %c0_89] : memref<128x128xf32, #tpu.memory_space<vmem>>, vector<128x128xf32>
    tpu.vector_store %arg5[%c0_88, %c0_89], %72 {strides = array<i32>} : memref<128x128xf32, #tpu.memory_space<vmem>>, vector<128x128xf32>,
    %c0_90 = arith.constant 0 : index
    %c2_91 = arith.constant 2 : index
    %c2_92 = arith.constant 2 : index
    %c0_93 = arith.constant 0 : index
    %74 = vector.load %arg1[%c0_90, %c2_91, %c2_92, %c0_93] : memref<1x10x18x128xbf16, #tpu.memory_space<vmem>>, vector<1x8x16x128xbf16>
    %75 = vector.shape_cast %74 : vector<1x8x16x128xbf16> to vector<8x16x128xbf16>
    %76 = vector.shape_cast %75 : vector<8x16x128xbf16> to vector<128x128xbf16>
    %c0_94 = arith.constant 0 : index
    %c0_95 = arith.constant 0 : index
    %77 = vector.load %arg5[%c0_94, %c0_95] : memref<128x128xf32, #tpu.memory_space<vmem>>, vector<128x128xf32>
    %c8 = arith.constant 8 : index
    %c0_96 = arith.constant 0 : index
    %c0_97 = arith.constant 0 : index
    %78 = vector.load %arg3[%c8, %c0_96, %c0_97] : memref<9x128x128xbf16, #tpu.memory_space<vmem>>, vector<1x128x128xbf16>
    %79 = vector.shape_cast %78 : vector<1x128x128xbf16> to vector<128x128xbf16>
    %cst_98 = arith.constant dense<0.000000e+00> : vector<128x128xf32>
    %80 = tpu.matmul %76, %79, %cst_98 {dimension_numbers = #tpu.dot_dimension_numbers<[1], [0], [0], [1], [0, 0, 1, 1], [], []>} : vector<128x128xbf16>, vector<128x128xbf16>, vector<128x128xf32> -> vector<128x128xf32>
    %81 = arith.addf %77, %80 : vector<128x128xf32>
    %c0_99 = arith.constant 0 : index
    %c0_100 = arith.constant 0 : index
    %82 = vector.load %arg5[%c0_99, %c0_100] : memref<128x128xf32, #tpu.memory_space<vmem>>, vector<128x128xf32>
    tpu.vector_store %arg5[%c0_99, %c0_100], %81 {strides = array<i32>} : memref<128x128xf32, #tpu.memory_space<vmem>>, vector<128x128xf32>,
    %c0_101 = arith.constant 0 : index
    %c0_102 = arith.constant 0 : index
    %83 = vector.load %arg5[%c0_101, %c0_102] : memref<128x128xf32, #tpu.memory_space<vmem>>, vector<128x128xf32>
    %cst_103 = arith.constant 0.000000e+00 : f32
    %84 = vector.broadcast %cst_103 : f32 to vector<128x128xf32>
    %85 = arith.maximumf %83, %84 : vector<128x128xf32>
    %c0_104 = arith.constant 0 : index
    %c0_105 = arith.constant 0 : index
    %c0_106 = arith.constant 0 : index
    %86 = vector.load %arg2[%c0_104, %c0_105, %c0_106] : memref<1x128x128xf32, #tpu.memory_space<vmem>>, vector<1x128x128xf32>
    %87 = vector.shape_cast %86 : vector<1x128x128xf32> to vector<128x128xf32>
    %88 = arith.addf %85, %87 : vector<128x128xf32>
    %c0_107 = arith.constant 0 : index
    %c0_108 = arith.constant 0 : index
    %c0_109 = arith.constant 0 : index
    %89 = vector.load %arg4[%c0_107, %c0_108, %c0_109] : memref<1x128x128xf32, #tpu.memory_space<vmem>>, vector<1x128x128xf32>
    %90 = vector.shape_cast %89 : vector<1x128x128xf32> to vector<128x128xf32>
    %91 = vector.shape_cast %88 : vector<128x128xf32> to vector<1x128x128xf32>
    tpu.vector_store %arg4[%c0_107, %c0_108, %c0_109], %91 {strides = array<i32>} : memref<1x128x128xf32, #tpu.memory_space<vmem>>, vector<1x128x128xf32>,
    return
  }
  func.func @transform_0(%arg0: i32) -> (i32, i32, i32, i32) {
    %c0_i32 = arith.constant 0 : i32
    %c0_i32_0 = arith.constant 0 : i32
    %c0_i32_1 = arith.constant 0 : i32
    %c0_i32_2 = arith.constant 0 : i32
    return %arg0, %c0_i32, %c0_i32_0, %c0_i32_1 : i32, i32, i32, i32
  }
  func.func @transform_1(%arg0: i32) -> (i32, i32, i32) {
    %c0_i32 = arith.constant 0 : i32
    %c0_i32_0 = arith.constant 0 : i32
    %c0_i32_1 = arith.constant 0 : i32
    return %arg0, %c0_i32, %c0_i32_0 : i32, i32, i32
  }
  func.func @transform_2(%arg0: i32) -> (i32, i32, i32) {
    %c0_i32 = arith.constant 0 : i32
    %c0_i32_0 = arith.constant 0 : i32
    %c0_i32_1 = arith.constant 0 : i32
    %c0_i32_2 = arith.constant 0 : i32
    return %c0_i32, %c0_i32_0, %c0_i32_1 : i32, i32, i32
  }
  func.func @transform_3(%arg0: i32) -> (i32, i32, i32) {
    %c0_i32 = arith.constant 0 : i32
    %c0_i32_0 = arith.constant 0 : i32
    %c0_i32_1 = arith.constant 0 : i32
    return %arg0, %c0_i32, %c0_i32_0 : i32, i32, i32
  }
}

</mosaic_0001>

<llo_original>
// kernel: _basic_conv3d_call.1
$region0: #{_basic_conv3d_call.1}
  #allocation0 [shape = 'u32[]', space=smem, size = 0x4, offset = 0x4, fixed_abs, tag = 'smem constant byte address 0x4 - core index']
  #allocation1 [shape = 'u32[72,128]{1,0:T(1,128)}', space=vmem, size = 0x9000, scoped, tag = 'internal scratch']
  #allocation2 [shape = 'f32[128,128]{1,0:T(8,128)}', space=vmem, size = 0x10000, scoped, tag = 'scratch operand']
  %s0 = inlined_call_operand.vmem [shape: bf16[2,10,18,128], index: 0, kind: input, shape index: {}]
  %s1 = inlined_call_operand.vmem [shape: f32[2,128,128], index: 1, kind: input, shape index: {}]
  %s2 = inlined_call_operand.vmem [shape: bf16[9,128,128], index: 2, kind: input, shape index: {}]
  %s3 = inlined_call_operand.vmem [shape: f32[2,128,128], index: 3, kind: output, shape index: {}]
  %s4 = sld [smem:[#allocation0]]
  $region45: #{_basic_conv3d_call.1} parent=0
    _
  %s6 = ssub.s32 1, %s4
  %s7 = scalar_select 0, %s6, %s4
  loop: start=0, step=1, limit=4
  $region2: #{_basic_conv3d_call.1} parent=0 // loop_pre_header
    _
  $region3: #{_basic_conv3d_call.1} parent=0 // loop_header
    %s9 = sphi 0, %s13
    %p10 = scmp.ge.s32.totalorder %s9, 4
    %s19 = sphi 0, %s21
    %s22 = sphi 0, %s19
    %s23 = sphi 0, %s22
    %s39 = sphi 0, %s23
    %s45 = sphi 0, %s47
    %s48 = sphi 0, %s45
    %s49 = sphi 0, %s48
    %s65 = sphi 0, %s49
    %s69 = sphi 0, %s69
    %s71 = sphi 0, %s69
    %s72 = sphi 0, %s71
    %s86 = sphi 0, %s72
    %s92 = sphi 0, %s94
    %s95 = sphi 0, %s92
    %s96 = sphi 0, %s95
    %s112 = sphi 0, %s96
  $region4: #{_basic_conv3d_call.1} parent=0 // loop_header_branch
    %12 = sbr.rel (%p10) target = $region8
  $region5: #{_basic_conv3d_call.1} parent=0 // loop_body
    %s14 = ssub.s32 %s9, 1
    %s15 = ssub.s32 %s9, 2
    %s16 = sadd.s32 %s9, 1
    %s17 = ssub.s32 %s9, %s16
    %p18 = scmp.eq.s32.totalorder %s17, 0
    %s20 = sadd.s32 %s19, 1
    %s21 = scalar_select %p18, %s19, %s20
    %p24 = pneg %p18
    %p25 = scmp.eq.s32.totalorder %s9, 1
    %p26 = por %p24, %p25
    %p27 = scmp.ne.s32.totalorder %s19, %s22
    %p28 = scmp.eq.s32.totalorder %s9, 0
    %p29 = por %p27, %p28
    %p30 = scmp.ne.s32.totalorder %s19, %s22
    %p31 = scmp.eq.s32.totalorder %s14, 1
    %p32 = por %p30, %p31
    %p33 = scmp.ne.s32.totalorder %s22, %s23
    %p34 = scmp.eq.s32.totalorder %s14, 0
    %p35 = por %p33, %p34
    %p36 = scmp.ne.s32.totalorder %s22, %s23
    %p37 = scmp.eq.s32.totalorder %s15, 1
    %p38 = por %p36, %p37
    %p40 = scmp.ne.s32.totalorder %s23, %s39
    %p41 = scmp.eq.s32.totalorder %s15, 0
    %p42 = por %p40, %p41
    %s43 = ssub.s32 %s9, %s16
    %p44 = scmp.eq.s32.totalorder %s43, 0
    %s46 = sadd.s32 %s45, 1
    %s47 = scalar_select %p44, %s45, %s46
    %p50 = pneg %p44
    %p51 = scmp.eq.s32.totalorder %s9, 1
    %p52 = por %p50, %p51
    %p53 = scmp.ne.s32.totalorder %s45, %s48
    %p54 = scmp.eq.s32.totalorder %s9, 0
    %p55 = por %p53, %p54
    %p56 = scmp.ne.s32.totalorder %s45, %s48
    %p57 = scmp.eq.s32.totalorder %s14, 1
    %p58 = por %p56, %p57
    %p59 = scmp.ne.s32.totalorder %s48, %s49
    %p60 = scmp.eq.s32.totalorder %s14, 0
    %p61 = por %p59, %p60
    %p62 = scmp.ne.s32.totalorder %s48, %s49
    %p63 = scmp.eq.s32.totalorder %s15, 1
    %p64 = por %p62, %p63
    %p66 = scmp.ne.s32.totalorder %s49, %s65
    %p67 = scmp.eq.s32.totalorder %s15, 0
    %p68 = por %p66, %p67
    %s70 = sadd.s32 %s69, 1
    %p73 = scmp.eq.s32.totalorder %s9, 1
    %p74 = scmp.ne.s32.totalorder %s69, %s71
    %p75 = scmp.eq.s32.totalorder %s9, 0
    %p76 = por %p74, %p75
    %p77 = scmp.ne.s32.totalorder %s69, %s71
    %p78 = scmp.eq.s32.totalorder %s14, 1
    %p79 = por %p77, %p78
    %p80 = scmp.ne.s32.totalorder %s71, %s72
    %p81 = scmp.eq.s32.totalorder %s14, 0
    %p82 = por %p80, %p81
    %p83 = scmp.ne.s32.totalorder %s71, %s72
    %p84 = scmp.eq.s32.totalorder %s15, 1
    %p85 = por %p83, %p84
    %p87 = scmp.ne.s32.totalorder %s72, %s86
    %p88 = scmp.eq.s32.totalorder %s15, 0
    %p89 = por %p87, %p88
    %s90 = ssub.s32 %s9, %s16
    %p91 = scmp.eq.s32.totalorder %s90, 0
    %s93 = sadd.s32 %s92, 1
    %s94 = scalar_select %p91, %s92, %s93
    %p97 = pneg %p91
    %p98 = scmp.eq.s32.totalorder %s9, 1
    %p99 = por %p97, %p98
    %p100 = scmp.ne.s32.totalorder %s92, %s95
    %p101 = scmp.eq.s32.totalorder %s9, 0
    %p102 = por %p100, %p101
    %p103 = scmp.ne.s32.totalorder %s92, %s95
    %p104 = scmp.eq.s32.totalorder %s14, 1
    %p105 = por %p103, %p104
    %p106 = scmp.ne.s32.totalorder %s95, %s96
    %p107 = scmp.eq.s32.totalorder %s14, 0
    %p108 = por %p106, %p107
    %p109 = scmp.ne.s32.totalorder %s95, %s96
    %p110 = scmp.eq.s32.totalorder %s15, 1
    %p111 = por %p109, %p110
    %p113 = scmp.ne.s32.totalorder %s96, %s112
    %p114 = scmp.eq.s32.totalorder %s15, 0
    %p115 = por %p113, %p114
    %p116 = scmp.le.s32.totalorder 1, %s9
    %p117 = scmp.lt.s32.totalorder %s9, 3
    %p118 = pnand %p116, %p117
    %p119 = pneg %p118
    // Predicated region
    $region9: #{_basic_conv3d_call.1} parent=5 // pred_check
      _
    $region10: #{_basic_conv3d_call.1} parent=5 // pred_check_branch
      %121 = sbr.rel (%p118) target = $region12
    $region11: #{_basic_conv3d_call.1} parent=5 // pred_region
      %s122 = ssub.s32 %s9, 1
      // Predicated region
      $region13: #{_basic_conv3d_call.1} parent=11 // pred_check
        %p123 = pneg %p82
      $region14: #{_basic_conv3d_call.1} parent=11 // pred_check_branch
        %125 = sbr.rel (%p123) target = $region16
      $region15: #{_basic_conv3d_call.1} parent=11 // pred_region
        _
      $region16: #{_basic_conv3d_call.1} parent=11 // pred_fallthru
        _
    $region12: #{_basic_conv3d_call.1} parent=5 // pred_fallthru
      _
    %p126 = scmp.lt.s32.totalorder %s9, 2
    // Predicated region
    $region17: #{_basic_conv3d_call.1} parent=5 // pred_check
      %p127 = pneg %p126
    $region18: #{_basic_conv3d_call.1} parent=5 // pred_check_branch
      %129 = sbr.rel (%p127) target = $region20
    $region19: #{_basic_conv3d_call.1} parent=5 // pred_region
      // Predicated region
      $region21: #{_basic_conv3d_call.1} parent=19 // pred_check
        %p130 = pneg %p29
      $region22: #{_basic_conv3d_call.1} parent=19 // pred_check_branch
        %132 = sbr.rel (%p130) target = $region24
      $region23: #{_basic_conv3d_call.1} parent=19 // pred_region
        %p133 = scmp.lt.s32.totalorder %s9, 1
        %s134 = scalar_select %p133, %s9, 1
        %s135 = smul.addr %s134, 30
        %s136 = smul.addr %s135, 4
        %s137 = scalar_lea.vmem %s0, %s136
      $region24: #{_basic_conv3d_call.1} parent=19 // pred_fallthru
        _
      // Predicated region
      $region25: #{_basic_conv3d_call.1} parent=19 // pred_check
        %p138 = pneg %p55
      $region26: #{_basic_conv3d_call.1} parent=19 // pred_check_branch
        %140 = sbr.rel (%p138) target = $region28
      $region27: #{_basic_conv3d_call.1} parent=19 // pred_region
        %p141 = scmp.lt.s32.totalorder %s9, 1
        %s142 = scalar_select %p141, %s9, 1
        %s143 = smul.addr %s142, 16
        %s144 = smul.addr %s143, 8
        %s145 = scalar_lea.vmem %s1, %s144
      $region28: #{_basic_conv3d_call.1} parent=19 // pred_fallthru
        _
    $region20: #{_basic_conv3d_call.1} parent=5 // pred_fallthru
      _
    %p146 = scmp.le.s32.totalorder 1, %s9
    %p147 = scmp.lt.s32.totalorder %s9, 3
    %p148 = pnand %p146, %p147
    %p149 = pneg %p148
    // Predicated region
    $region29: #{_basic_conv3d_call.1} parent=5 // pred_check
      _
    $region30: #{_basic_conv3d_call.1} parent=5 // pred_check_branch
      %151 = sbr.rel (%p148) target = $region32
    $region31: #{_basic_conv3d_call.1} parent=5 // pred_region
      %s152 = ssub.s32 %s9, 1
      %p153 = scmp.lt.s32.totalorder %s14, 1
      %s154 = scalar_select %p153, %s14, 1
      %s155 = smul.addr %s154, 30
      %s156 = smul.addr %s155, 4
      %s157 = scalar_lea.vmem %s0, %s156
      %p158 = pneg %p35
      %p159 = pneg %p32
      %p160 = scmp.lt.s32.totalorder %s14, 1
      %s161 = scalar_select %p160, %s14, 1
      %s162 = smul.addr %s161, 16
      %s163 = smul.addr %s162, 8
      %s164 = scalar_lea.vmem %s1, %s163
      %p165 = pneg %p61
      %p166 = pneg %p58
      %p167 = pneg %p82
      %p168 = pneg %p79
      %p169 = pneg %p108
      %p170 = pneg %p105
      %p171 = scmp.lt.s32.totalorder %s14, 1
      %s172 = scalar_select %p171, %s14, 1
      %s173 = smul.addr %s172, 16
      %s174 = smul.addr %s173, 8
      %s175 = scalar_lea.vmem %s3, %s174
      %p176 = scmp.lt.s32.totalorder %s14, 1
      %s177 = scalar_select %p176, %s14, 1
      %s178 = smul.addr %s177, 30
      %s179 = smul.addr %s178, 4
      %s180 = scalar_lea.vmem %s0, %s179
      %p181 = scmp.lt.s32.totalorder %s14, 1
      %s182 = scalar_select %p181, %s14, 1
      %s183 = smul.addr %s182, 16
      %s184 = smul.addr %s183, 8
      %s185 = scalar_lea.vmem %s1, %s184
      %p186 = scmp.lt.s32.totalorder %s14, 1
      %s187 = scalar_select %p186, %s14, 1
      %s188 = smul.addr %s187, 16
      %s189 = smul.addr %s188, 8
      %s190 = scalar_lea.vmem %s3, %s189
      %191 = vst [vmem:[#allocation2] sm:$0xff] 0.0
      %192 = vst [vmem:[#allocation2 + $0x8] sm:$0xff] 0.0
      %193 = vst [vmem:[#allocation2 + $0x10] sm:$0xff] 0.0
      %194 = vst [vmem:[#allocation2 + $0x18] sm:$0xff] 0.0
      %195 = vst [vmem:[#allocation2 + $0x20] sm:$0xff] 0.0
      %196 = vst [vmem:[#allocation2 + $0x28] sm:$0xff] 0.0
      %197 = vst [vmem:[#allocation2 + $0x30] sm:$0xff] 0.0
      %198 = vst [vmem:[#allocation2 + $0x38] sm:$0xff] 0.0
      %199 = vst [vmem:[#allocation2 + $0x40] sm:$0xff] 0.0
      %200 = vst [vmem:[#allocation2 + $0x48] sm:$0xff] 0.0
      %201 = vst [vmem:[#allocation2 + $0x50] sm:$0xff] 0.0
      %202 = vst [vmem:[#allocation2 + $0x58] sm:$0xff] 0.0
      %203 = vst [vmem:[#allocation2 + $0x60] sm:$0xff] 0.0
      %204 = vst [vmem:[#allocation2 + $0x68] sm:$0xff] 0.0
      %205 = vst [vmem:[#allocation2 + $0x70] sm:$0xff] 0.0
      %206 = vst [vmem:[#allocation2 + $0x78] sm:$0xff] 0.0
      %v207 = vld [vmem:[%s180] sm:$0xf]
      %v208 = vld [vmem:[%s180 + $0x4] sm:$0xf]
      %v209 = vld [vmem:[%s180 + $0xc] sm:$0xf]
      %v210 = vld [vmem:[%s180 + $0x10] sm:$0xf]
      %v211 = vld [vmem:[%s180 + $0x18] sm:$0xf]
      %v212 = vld [vmem:[%s180 + $0x1c] sm:$0xf]
      %v213 = vld [vmem:[%s180 + $0x24] sm:$0xf]
      %v214 = vld [vmem:[%s180 + $0x28] sm:$0xf]
      %v215 = vld [vmem:[%s180 + $0x30] sm:$0xf]
      %v216 = vld [vmem:[%s180 + $0x34] sm:$0xf]
      %v217 = vld [vmem:[%s180 + $0x3c] sm:$0xf]
      %v218 = vld [vmem:[%s180 + $0x40] sm:$0xf]
      %v219 = vld [vmem:[%s180 + $0x48] sm:$0xf]
      %v220 = vld [vmem:[%s180 + $0x4c] sm:$0xf]
      %v221 = vld [vmem:[%s180 + $0x54] sm:$0xf]
      %v222 = vld [vmem:[%s180 + $0x58] sm:$0xf]
      %v223 = vld [vmem:[#allocation2] sm:$0xff]
      %v224 = vld [vmem:[#allocation2 + $0x8] sm:$0xff]
      %v225 = vld [vmem:[#allocation2 + $0x10] sm:$0xff]
      %v226 = vld [vmem:[#allocation2 + $0x18] sm:$0xff]
      %v227 = vld [vmem:[#allocation2 + $0x20] sm:$0xff]
      %v228 = vld [vmem:[#allocation2 + $0x28] sm:$0xff]
      %v229 = vld [vmem:[#allocation2 + $0x30] sm:$0xff]
      %v230 = vld [vmem:[#allocation2 + $0x38] sm:$0xff]
      %v231 = vld [vmem:[#allocation2 + $0x40] sm:$0xff]
      %v232 = vld [vmem:[#allocation2 + $0x48] sm:$0xff]
      %v233 = vld [vmem:[#allocation2 + $0x50] sm:$0xff]
      %v234 = vld [vmem:[#allocation2 + $0x58] sm:$0xff]
      %v235 = vld [vmem:[#allocation2 + $0x60] sm:$0xff]
      %v236 = vld [vmem:[#allocation2 + $0x68] sm:$0xff]
      %v237 = vld [vmem:[#allocation2 + $0x70] sm:$0xff]
      %v238 = vld [vmem:[#allocation2 + $0x78] sm:$0xff]
      %v239 = vld [vmem:[%s2] sm:$0xf]
      %v240 = vld [vmem:[%s2 + $0x4] sm:$0xf]
      %v241 = vld [vmem:[%s2 + $0x8] sm:$0xf]
      %v242 = vld [vmem:[%s2 + $0xc] sm:$0xf]
      %v243 = vld [vmem:[%s2 + $0x10] sm:$0xf]
      %v244 = vld [vmem:[%s2 + $0x14] sm:$0xf]
      %v245 = vld [vmem:[%s2 + $0x18] sm:$0xf]
      %v246 = vld [vmem:[%s2 + $0x1c] sm:$0xf]
      %v247 = vld [vmem:[%s2 + $0x20] sm:$0xf]
      %v248 = vld [vmem:[%s2 + $0x24] sm:$0xf]
      %v249 = vld [vmem:[%s2 + $0x28] sm:$0xf]
      %v250 = vld [vmem:[%s2 + $0x2c] sm:$0xf]
      %v251 = vld [vmem:[%s2 + $0x30] sm:$0xf]
      %v252 = vld [vmem:[%s2 + $0x34] sm:$0xf]
      %v253 = vld [vmem:[%s2 + $0x38] sm:$0xf]
      %v254 = vld [vmem:[%s2 + $0x3c] sm:$0xf]
      %v271 = vunpack.c.l.b16 %v207
      %v272 = vunpack.c.l.b16 %v208
      %v273 = vunpack.c.l.b16 %v209
      %v274 = vunpack.c.l.b16 %v210
      %v275 = vunpack.c.l.b16 %v211
      %v276 = vunpack.c.l.b16 %v212
      %v277 = vunpack.c.l.b16 %v213
      %v278 = vunpack.c.l.b16 %v214
      %v279 = vunpack.c.l.b16 %v215
      %v280 = vunpack.c.l.b16 %v216
      %v281 = vunpack.c.l.b16 %v217
      %v282 = vunpack.c.l.b16 %v218
      %v283 = vunpack.c.l.b16 %v219
      %v284 = vunpack.c.l.b16 %v220
      %v285 = vunpack.c.l.b16 %v221
      %v286 = vunpack.c.l.b16 %v222
      %v287 = vpack.c.b16 %v272, %v271
      %v288 = vpack.c.b16 %v274, %v273
      %v289 = vpack.c.b16 %v276, %v275
      %v290 = vpack.c.b16 %v278, %v277
      %v291 = vpack.c.b16 %v280, %v279
      %v292 = vpack.c.b16 %v282, %v281
      %v293 = vpack.c.b16 %v284, %v283
      %v294 = vpack.c.b16 %v286, %v285
      %v319 = vunpack.c.l.b16 %v239
      %v320 = vunpack.c.l.b16 %v240
      %v321 = vunpack.c.l.b16 %v241
      %v322 = vunpack.c.l.b16 %v242
      %v323 = vunpack.c.l.b16 %v243
      %v324 = vunpack.c.l.b16 %v244
      %v325 = vunpack.c.l.b16 %v245
      %v326 = vunpack.c.l.b16 %v246
      %v327 = vunpack.c.l.b16 %v247
      %v328 = vunpack.c.l.b16 %v248
      %v329 = vunpack.c.l.b16 %v249
      %v330 = vunpack.c.l.b16 %v250
      %v331 = vunpack.c.l.b16 %v251
      %v332 = vunpack.c.l.b16 %v252
      %v333 = vunpack.c.l.b16 %v253
      %v334 = vunpack.c.l.b16 %v254
      %v335 = vpack.c.b16 %v320, %v319
      %v336 = vpack.c.b16 %v322, %v321
      %v337 = vpack.c.b16 %v324, %v323
      %v338 = vpack.c.b16 %v326, %v325
      %v339 = vpack.c.b16 %v328, %v327
      %v340 = vpack.c.b16 %v330, %v329
      %v341 = vpack.c.b16 %v332, %v331
      %v342 = vpack.c.b16 %v334, %v333
      %351 = vmatpush.bf16.msra.mxu0 %v342
      %352 = vmatpush.bf16.msra.mxu0 %v341
      %353 = vmatpush.bf16.msra.mxu0 %v340
      %354 = vmatpush.bf16.msra.mxu0 %v339
      %355 = vmatpush.bf16.msra.mxu0 %v338
      %356 = vmatpush.bf16.msra.mxu0 %v337
      %357 = vmatpush.bf16.msra.mxu0 %v336
      %358 = vmatpush.bf16.msra.mxu0 %v335
      %359 = vmatmul.bf16.gmra.mxu0 %v287
      %v360 = vpop.f32.mrf.mxu0
      %v361 = vadd.f32 0.0, %v360
      %v362 = vpop.f32.mrf.mxu0
      %v363 = vadd.f32 0.0, %v362
      %364 = vmatmul.bf16.gmra.mxu0 %v288
      %v365 = vpop.f32.mrf.mxu0
      %v366 = vadd.f32 0.0, %v365
      %v367 = vpop.f32.mrf.mxu0
      %v368 = vadd.f32 0.0, %v367
      %369 = vmatmul.bf16.gmra.mxu0 %v289
      %v370 = vpop.f32.mrf.mxu0
      %v371 = vadd.f32 0.0, %v370
      %v372 = vpop.f32.mrf.mxu0
      %v373 = vadd.f32 0.0, %v372
      %374 = vmatmul.bf16.gmra.mxu0 %v290
      %v375 = vpop.f32.mrf.mxu0
      %v376 = vadd.f32 0.0, %v375
      %v377 = vpop.f32.mrf.mxu0
      %v378 = vadd.f32 0.0, %v377
      %379 = vmatmul.bf16.gmra.mxu0 %v291
      %v380 = vpop.f32.mrf.mxu0
      %v381 = vadd.f32 0.0, %v380
      %v382 = vpop.f32.mrf.mxu0
      %v383 = vadd.f32 0.0, %v382
      %384 = vmatmul.bf16.gmra.mxu0 %v292
      %v385 = vpop.f32.mrf.mxu0
      %v386 = vadd.f32 0.0, %v385
      %v387 = vpop.f32.mrf.mxu0
      %v388 = vadd.f32 0.0, %v387
      %389 = vmatmul.bf16.gmra.mxu0 %v293
      %v390 = vpop.f32.mrf.mxu0
      %v391 = vadd.f32 0.0, %v390
      %v392 = vpop.f32.mrf.mxu0
      %v393 = vadd.f32 0.0, %v392
      %394 = vmatmul.bf16.gmra.mxu0 %v294
      %v395 = vpop.f32.mrf.mxu0
      %v396 = vadd.f32 0.0, %v395
      %v397 = vpop.f32.mrf.mxu0
      %v398 = vadd.f32 0.0, %v397
      %399 = vdwg.mxu0
      %v400 = vadd.f32 %v223, %v361
      %v401 = vadd.f32 %v224, %v363
      %v402 = vadd.f32 %v225, %v366
      %v403 = vadd.f32 %v226, %v368
      %v404 = vadd.f32 %v227, %v371
      %v405 = vadd.f32 %v228, %v373
      %v406 = vadd.f32 %v229, %v376
      %v407 = vadd.f32 %v230, %v378
      %v408 = vadd.f32 %v231, %v381
      %v409 = vadd.f32 %v232, %v383
      %v410 = vadd.f32 %v233, %v386
      %v411 = vadd.f32 %v234, %v388
      %v412 = vadd.f32 %v235, %v391
      %v413 = vadd.f32 %v236, %v393
      %v414 = vadd.f32 %v237, %v396
      %v415 = vadd.f32 %v238, %v398
      %416 = vst [vmem:[#allocation2] sm:$0xff] %v400
      %417 = vst [vmem:[#allocation2 + $0x8] sm:$0xff] %v401
      %418 = vst [vmem:[#allocation2 + $0x10] sm:$0xff] %v402
      %419 = vst [vmem:[#allocation2 + $0x18] sm:$0xff] %v403
      %420 = vst [vmem:[#allocation2 + $0x20] sm:$0xff] %v404
      %421 = vst [vmem:[#allocation2 + $0x28] sm:$0xff] %v405
      %422 = vst [vmem:[#allocation2 + $0x30] sm:$0xff] %v406
      %423 = vst [vmem:[#allocation2 + $0x38] sm:$0xff] %v407
      %424 = vst [vmem:[#allocation2 + $0x40] sm:$0xff] %v408
      %425 = vst [vmem:[#allocation2 + $0x48] sm:$0xff] %v409
      %426 = vst [vmem:[#allocation2 + $0x50] sm:$0xff] %v410
      %427 = vst [vmem:[#allocation2 + $0x58] sm:$0xff] %v411
      %428 = vst [vmem:[#allocation2 + $0x60] sm:$0xff] %v412
      %429 = vst [vmem:[#allocation2 + $0x68] sm:$0xff] %v413
      %430 = vst [vmem:[#allocation2 + $0x70] sm:$0xff] %v414
      %431 = vst [vmem:[#allocation2 + $0x78] sm:$0xff] %v415
      %v432 = vld [vmem:[%s180] sm:$0xf]
      %v433 = vld [vmem:[%s180 + $0x4] sm:$0xf]
      %v434 = vld [vmem:[%s180 + $0x8] sm:$0x1]
      %v435 = vld [vmem:[%s180 + $0xc] sm:$0xf]
      %v436 = vld [vmem:[%s180 + $0x10] sm:$0xf]
      %v437 = vld [vmem:[%s180 + $0x14] sm:$0x1]
      %v438 = vld [vmem:[%s180 + $0x18] sm:$0xf]
      %v439 = vld [vmem:[%s180 + $0x1c] sm:$0xf]
      %v440 = vld [vmem:[%s180 + $0x20] sm:$0x1]
      %v441 = vld [vmem:[%s180 + $0x24] sm:$0xf]
      %v442 = vld [vmem:[%s180 + $0x28] sm:$0xf]
      %v443 = vld [vmem:[%s180 + $0x2c] sm:$0x1]
      %v444 = vld [vmem:[%s180 + $0x30] sm:$0xf]
      %v445 = vld [vmem:[%s180 + $0x34] sm:$0xf]
      %v446 = vld [vmem:[%s180 + $0x38] sm:$0x1]
      %v447 = vld [vmem:[%s180 + $0x3c] sm:$0xf]
      %v448 = vld [vmem:[%s180 + $0x40] sm:$0xf]
      %v449 = vld [vmem:[%s180 + $0x44] sm:$0x1]
      %v450 = vld [vmem:[%s180 + $0x48] sm:$0xf]
      %v451 = vld [vmem:[%s180 + $0x4c] sm:$0xf]
      %v452 = vld [vmem:[%s180 + $0x50] sm:$0x1]
      %v453 = vld [vmem:[%s180 + $0x54] sm:$0xf]
      %v454 = vld [vmem:[%s180 + $0x58] sm:$0xf]
      %v455 = vld [vmem:[%s180 + $0x5c] sm:$0x1]
      %vm456 = vsmask.f32 3328
      %vm457 = vsmask.f32 7440
      %vm458 = vmor %vm456, %vm457
      %v460 = vshrl.u32 %v432, 16
      %v462 = vrot.slane %v460, 4
      %v463 = vshll.u32 %v432, 16
      %v465 = vrot.slane %v463, 5
      %v466 = vor.u32 %v462, %v465
      %v467 = vrot.slane %v466, 4
      %v469 = vshll.u32 %v433, 16
      %v471 = vrot.slane %v469, 5
      %v472 = vsel %vm458, %v467, %v471
      %v473 = vshrl.u32 %v433, 16
      %v475 = vrot.slane %v473, 4
      %v476 = vor.u32 %v475, %v471
      %v477 = vrot.slane %v476, 4
      %v479 = vshll.u32 %v434, 16
      %v481 = vrot.slane %v479, 5
      %v482 = vsel %vm458, %v477, %v481
      %v484 = vshrl.u32 %v435, 16
      %v486 = vrot.slane %v484, 4
      %v487 = vshll.u32 %v435, 16
      %v489 = vrot.slane %v487, 5
      %v490 = vor.u32 %v486, %v489
      %v491 = vrot.slane %v490, 4
      %v493 = vshll.u32 %v436, 16
      %v495 = vrot.slane %v493, 5
      %v496 = vsel %vm458, %v491, %v495
      %v497 = vshrl.u32 %v436, 16
      %v499 = vrot.slane %v497, 4
      %v500 = vor.u32 %v499, %v495
      %v501 = vrot.slane %v500, 4
      %v503 = vshll.u32 %v437, 16
      %v505 = vrot.slane %v503, 5
      %v506 = vsel %vm458, %v501, %v505
      %v508 = vshrl.u32 %v438, 16
      %v510 = vrot.slane %v508, 4
      %v511 = vshll.u32 %v438, 16
      %v513 = vrot.slane %v511, 5
      %v514 = vor.u32 %v510, %v513
      %v515 = vrot.slane %v514, 4
      %v517 = vshll.u32 %v439, 16
      %v519 = vrot.slane %v517, 5
      %v520 = vsel %vm458, %v515, %v519
      %v521 = vshrl.u32 %v439, 16
      %v523 = vrot.slane %v521, 4
      %v524 = vor.u32 %v523, %v519
      %v525 = vrot.slane %v524, 4
      %v527 = vshll.u32 %v440, 16
      %v529 = vrot.slane %v527, 5
      %v530 = vsel %vm458, %v525, %v529
      %v532 = vshrl.u32 %v441, 16
      %v534 = vrot.slane %v532, 4
      %v535 = vshll.u32 %v441, 16
      %v537 = vrot.slane %v535, 5
      %v538 = vor.u32 %v534, %v537
      %v539 = vrot.slane %v538, 4
      %v541 = vshll.u32 %v442, 16
      %v543 = vrot.slane %v541, 5
      %v544 = vsel %vm458, %v539, %v543
      %v545 = vshrl.u32 %v442, 16
      %v547 = vrot.slane %v545, 4
      %v548 = vor.u32 %v547, %v543
      %v549 = vrot.slane %v548, 4
      %v551 = vshll.u32 %v443, 16
      %v553 = vrot.slane %v551, 5
      %v554 = vsel %vm458, %v549, %v553
      %v556 = vshrl.u32 %v444, 16
      %v558 = vrot.slane %v556, 4
      %v559 = vshll.u32 %v444, 16
      %v561 = vrot.slane %v559, 5
      %v562 = vor.u32 %v558, %v561
      %v563 = vrot.slane %v562, 4
      %v565 = vshll.u32 %v445, 16
      %v567 = vrot.slane %v565, 5
      %v568 = vsel %vm458, %v563, %v567
      %v569 = vshrl.u32 %v445, 16
      %v571 = vrot.slane %v569, 4
      %v572 = vor.u32 %v571, %v567
      %v573 = vrot.slane %v572, 4
      %v575 = vshll.u32 %v446, 16
      %v577 = vrot.slane %v575, 5
      %v578 = vsel %vm458, %v573, %v577
      %v580 = vshrl.u32 %v447, 16
      %v582 = vrot.slane %v580, 4
      %v583 = vshll.u32 %v447, 16
      %v585 = vrot.slane %v583, 5
      %v586 = vor.u32 %v582, %v585
      %v587 = vrot.slane %v586, 4
      %v589 = vshll.u32 %v448, 16
      %v591 = vrot.slane %v589, 5
      %v592 = vsel %vm458, %v587, %v591
      %v593 = vshrl.u32 %v448, 16
      %v595 = vrot.slane %v593, 4
      %v596 = vor.u32 %v595, %v591
      %v597 = vrot.slane %v596, 4
      %v599 = vshll.u32 %v449, 16
      %v601 = vrot.slane %v599, 5
      %v602 = vsel %vm458, %v597, %v601
      %v604 = vshrl.u32 %v450, 16
      %v606 = vrot.slane %v604, 4
      %v607 = vshll.u32 %v450, 16
      %v609 = vrot.slane %v607, 5
      %v610 = vor.u32 %v606, %v609
      %v611 = vrot.slane %v610, 4
      %v613 = vshll.u32 %v451, 16
      %v615 = vrot.slane %v613, 5
      %v616 = vsel %vm458, %v611, %v615
      %v617 = vshrl.u32 %v451, 16
      %v619 = vrot.slane %v617, 4
      %v620 = vor.u32 %v619, %v615
      %v621 = vrot.slane %v620, 4
      %v623 = vshll.u32 %v452, 16
      %v625 = vrot.slane %v623, 5
      %v626 = vsel %vm458, %v621, %v625
      %v628 = vshrl.u32 %v453, 16
      %v630 = vrot.slane %v628, 4
      %v631 = vshll.u32 %v453, 16
      %v633 = vrot.slane %v631, 5
      %v634 = vor.u32 %v630, %v633
      %v635 = vrot.slane %v634, 4
      %v637 = vshll.u32 %v454, 16
      %v639 = vrot.slane %v637, 5
      %v640 = vsel %vm458, %v635, %v639
      %v641 = vshrl.u32 %v454, 16
      %v643 = vrot.slane %v641, 4
      %v644 = vor.u32 %v643, %v639
      %v645 = vrot.slane %v644, 4
      %v647 = vshll.u32 %v455, 16
      %v649 = vrot.slane %v647, 5
      %v650 = vsel %vm458, %v645, %v649
      %v651 = vld [vmem:[#allocation2] sm:$0xff]
      %v652 = vld [vmem:[#allocation2 + $0x8] sm:$0xff]
      %v653 = vld [vmem:[#allocation2 + $0x10] sm:$0xff]
      %v654 = vld [vmem:[#allocation2 + $0x18] sm:$0xff]
      %v655 = vld [vmem:[#allocation2 + $0x20] sm:$0xff]
      %v656 = vld [vmem:[#allocation2 + $0x28] sm:$0xff]
      %v657 = vld [vmem:[#allocation2 + $0x30] sm:$0xff]
      %v658 = vld [vmem:[#allocation2 + $0x38] sm:$0xff]
      %v659 = vld [vmem:[#allocation2 + $0x40] sm:$0xff]
      %v660 = vld [vmem:[#allocation2 + $0x48] sm:$0xff]
      %v661 = vld [vmem:[#allocation2 + $0x50] sm:$0xff]
      %v662 = vld [vmem:[#allocation2 + $0x58] sm:$0xff]
      %v663 = vld [vmem:[#allocation2 + $0x60] sm:$0xff]
      %v664 = vld [vmem:[#allocation2 + $0x68] sm:$0xff]
      %v665 = vld [vmem:[#allocation2 + $0x70] sm:$0xff]
      %v666 = vld [vmem:[#allocation2 + $0x78] sm:$0xff]
      %s667 = scalar_lea.vmem %s2, 64
      %v668 = vld [vmem:[%s667] sm:$0xf]
      %v669 = vld [vmem:[%s667 + $0x4] sm:$0xf]
      %v670 = vld [vmem:[%s667 + $0x8] sm:$0xf]
      %v671 = vld [vmem:[%s667 + $0xc] sm:$0xf]
      %v672 = vld [vmem:[%s667 + $0x10] sm:$0xf]
      %v673 = vld [vmem:[%s667 + $0x14] sm:$0xf]
      %v674 = vld [vmem:[%s667 + $0x18] sm:$0xf]
      %v675 = vld [vmem:[%s667 + $0x1c] sm:$0xf]
      %v676 = vld [vmem:[%s667 + $0x20] sm:$0xf]
      %v677 = vld [vmem:[%s667 + $0x24] sm:$0xf]
      %v678 = vld [vmem:[%s667 + $0x28] sm:$0xf]
      %v679 = vld [vmem:[%s667 + $0x2c] sm:$0xf]
      %v680 = vld [vmem:[%s667 + $0x30] sm:$0xf]
      %v681 = vld [vmem:[%s667 + $0x34] sm:$0xf]
      %v682 = vld [vmem:[%s667 + $0x38] sm:$0xf]
      %v683 = vld [vmem:[%s667 + $0x3c] sm:$0xf]
      %v684 = vunpack.c.l.b16 %v472
      %v685 = vunpack.c.l.b16 %v482
      %v686 = vunpack.c.l.b16 %v496
      %v687 = vunpack.c.l.b16 %v506
      %v688 = vunpack.c.l.b16 %v520
      %v689 = vunpack.c.l.b16 %v530
      %v690 = vunpack.c.l.b16 %v544
      %v691 = vunpack.c.l.b16 %v554
      %v692 = vunpack.c.l.b16 %v568
      %v693 = vunpack.c.l.b16 %v578
      %v694 = vunpack.c.l.b16 %v592
      %v695 = vunpack.c.l.b16 %v602
      %v696 = vunpack.c.l.b16 %v616
      %v697 = vunpack.c.l.b16 %v626
      %v698 = vunpack.c.l.b16 %v640
      %v699 = vunpack.c.l.b16 %v650
      %v700 = vpack.c.b16 %v685, %v684
      %v701 = vpack.c.b16 %v687, %v686
      %v702 = vpack.c.b16 %v689, %v688
      %v703 = vpack.c.b16 %v691, %v690
      %v704 = vpack.c.b16 %v693, %v692
      %v705 = vpack.c.b16 %v695, %v694
      %v706 = vpack.c.b16 %v697, %v696
      %v707 = vpack.c.b16 %v699, %v698
      %v732 = vunpack.c.l.b16 %v668
      %v733 = vunpack.c.l.b16 %v669
      %v734 = vunpack.c.l.b16 %v670
      %v735 = vunpack.c.l.b16 %v671
      %v736 = vunpack.c.l.b16 %v672
      %v737 = vunpack.c.l.b16 %v673
      %v738 = vunpack.c.l.b16 %v674
      %v739 = vunpack.c.l.b16 %v675
      %v740 = vunpack.c.l.b16 %v676
      %v741 = vunpack.c.l.b16 %v677
      %v742 = vunpack.c.l.b16 %v678
      %v743 = vunpack.c.l.b16 %v679
      %v744 = vunpack.c.l.b16 %v680
      %v745 = vunpack.c.l.b16 %v681
      %v746 = vunpack.c.l.b16 %v682
      %v747 = vunpack.c.l.b16 %v683
      %v748 = vpack.c.b16 %v733, %v732
      %v749 = vpack.c.b16 %v735, %v734
      %v750 = vpack.c.b16 %v737, %v736
      %v751 = vpack.c.b16 %v739, %v738
      %v752 = vpack.c.b16 %v741, %v740
      %v753 = vpack.c.b16 %v743, %v742
      %v754 = vpack.c.b16 %v745, %v744
      %v755 = vpack.c.b16 %v747, %v746
      %764 = vmatpush.bf16.msra.mxu0 %v755
      %765 = vmatpush.bf16.msra.mxu0 %v754
      %766 = vmatpush.bf16.msra.mxu0 %v753
      %767 = vmatpush.bf16.msra.mxu0 %v752
      %768 = vmatpush.bf16.msra.mxu0 %v751
      %769 = vmatpush.bf16.msra.mxu0 %v750
      %770 = vmatpush.bf16.msra.mxu0 %v749
      %771 = vmatpush.bf16.msra.mxu0 %v748
      %772 = vmatmul.bf16.gmra.mxu0 %v700
      %v773 = vpop.f32.mrf.mxu0
      %v774 = vadd.f32 0.0, %v773
      %v775 = vpop.f32.mrf.mxu0
      %v776 = vadd.f32 0.0, %v775
      %777 = vmatmul.bf16.gmra.mxu0 %v701
      %v778 = vpop.f32.mrf.mxu0
      %v779 = vadd.f32 0.0, %v778
      %v780 = vpop.f32.mrf.mxu0
      %v781 = vadd.f32 0.0, %v780
      %782 = vmatmul.bf16.gmra.mxu0 %v702
      %v783 = vpop.f32.mrf.mxu0
      %v784 = vadd.f32 0.0, %v783
      %v785 = vpop.f32.mrf.mxu0
      %v786 = vadd.f32 0.0, %v785
      %787 = vmatmul.bf16.gmra.mxu0 %v703
      %v788 = vpop.f32.mrf.mxu0
      %v789 = vadd.f32 0.0, %v788
      %v790 = vpop.f32.mrf.mxu0
      %v791 = vadd.f32 0.0, %v790
      %792 = vmatmul.bf16.gmra.mxu0 %v704
      %v793 = vpop.f32.mrf.mxu0
      %v794 = vadd.f32 0.0, %v793
      %v795 = vpop.f32.mrf.mxu0
      %v796 = vadd.f32 0.0, %v795
      %797 = vmatmul.bf16.gmra.mxu0 %v705
      %v798 = vpop.f32.mrf.mxu0
      %v799 = vadd.f32 0.0, %v798
      %v800 = vpop.f32.mrf.mxu0
      %v801 = vadd.f32 0.0, %v800
      %802 = vmatmul.bf16.gmra.mxu0 %v706
      %v803 = vpop.f32.mrf.mxu0
      %v804 = vadd.f32 0.0, %v803
      %v805 = vpop.f32.mrf.mxu0
      %v806 = vadd.f32 0.0, %v805
      %807 = vmatmul.bf16.gmra.mxu0 %v707
      %v808 = vpop.f32.mrf.mxu0
      %v809 = vadd.f32 0.0, %v808
      %v810 = vpop.f32.mrf.mxu0
      %v811 = vadd.f32 0.0, %v810
      %812 = vdwg.mxu0
      %v813 = vadd.f32 %v651, %v774
      %v814 = vadd.f32 %v652, %v776
      %v815 = vadd.f32 %v653, %v779
      %v816 = vadd.f32 %v654, %v781
      %v817 = vadd.f32 %v655, %v784
      %v818 = vadd.f32 %v656, %v786
      %v819 = vadd.f32 %v657, %v789
      %v820 = vadd.f32 %v658, %v791
      %v821 = vadd.f32 %v659, %v794
      %v822 = vadd.f32 %v660, %v796
      %v823 = vadd.f32 %v661, %v799
      %v824 = vadd.f32 %v662, %v801
      %v825 = vadd.f32 %v663, %v804
      %v826 = vadd.f32 %v664, %v806
      %v827 = vadd.f32 %v665, %v809
      %v828 = vadd.f32 %v666, %v811
      %829 = vst [vmem:[#allocation2] sm:$0xff] %v813
      %830 = vst [vmem:[#allocation2 + $0x8] sm:$0xff] %v814
      %831 = vst [vmem:[#allocation2 + $0x10] sm:$0xff] %v815
      %832 = vst [vmem:[#allocation2 + $0x18] sm:$0xff] %v816
      %833 = vst [vmem:[#allocation2 + $0x20] sm:$0xff] %v817
      %834 = vst [vmem:[#allocation2 + $0x28] sm:$0xff] %v818
      %835 = vst [vmem:[#allocation2 + $0x30] sm:$0xff] %v819
      %836 = vst [vmem:[#allocation2 + $0x38] sm:$0xff] %v820
      %837 = vst [vmem:[#allocation2 + $0x40] sm:$0xff] %v821
      %838 = vst [vmem:[#allocation2 + $0x48] sm:$0xff] %v822
      %839 = vst [vmem:[#allocation2 + $0x50] sm:$0xff] %v823
      %840 = vst [vmem:[#allocation2 + $0x58] sm:$0xff] %v824
      %841 = vst [vmem:[#allocation2 + $0x60] sm:$0xff] %v825
      %842 = vst [vmem:[#allocation2 + $0x68] sm:$0xff] %v826
      %843 = vst [vmem:[#allocation2 + $0x70] sm:$0xff] %v827
      %844 = vst [vmem:[#allocation2 + $0x78] sm:$0xff] %v828
      %v845 = vld [vmem:[%s180] sm:$0xe]
      %v846 = vld [vmem:[%s180 + $0x4] sm:$0xf]
      %v847 = vld [vmem:[%s180 + $0x8] sm:$0x1]
      %v848 = vld [vmem:[%s180 + $0xc] sm:$0xe]
      %v849 = vld [vmem:[%s180 + $0x10] sm:$0xf]
      %v850 = vld [vmem:[%s180 + $0x14] sm:$0x1]
      %v851 = vld [vmem:[%s180 + $0x18] sm:$0xe]
      %v852 = vld [vmem:[%s180 + $0x1c] sm:$0xf]
      %v853 = vld [vmem:[%s180 + $0x20] sm:$0x1]
      %v854 = vld [vmem:[%s180 + $0x24] sm:$0xe]
      %v855 = vld [vmem:[%s180 + $0x28] sm:$0xf]
      %v856 = vld [vmem:[%s180 + $0x2c] sm:$0x1]
      %v857 = vld [vmem:[%s180 + $0x30] sm:$0xe]
      %v858 = vld [vmem:[%s180 + $0x34] sm:$0xf]
      %v859 = vld [vmem:[%s180 + $0x38] sm:$0x1]
      %v860 = vld [vmem:[%s180 + $0x3c] sm:$0xe]
      %v861 = vld [vmem:[%s180 + $0x40] sm:$0xf]
      %v862 = vld [vmem:[%s180 + $0x44] sm:$0x1]
      %v863 = vld [vmem:[%s180 + $0x48] sm:$0xe]
      %v864 = vld [vmem:[%s180 + $0x4c] sm:$0xf]
      %v865 = vld [vmem:[%s180 + $0x50] sm:$0x1]
      %v866 = vld [vmem:[%s180 + $0x54] sm:$0xe]
      %v867 = vld [vmem:[%s180 + $0x58] sm:$0xf]
      %v868 = vld [vmem:[%s180 + $0x5c] sm:$0x1]
      %vm893 = vcmask 1042432
      %vm894 = vcmask 1046532
      %vm895 = vmor %vm893, %vm894
      %v896 = vrot.slane %v845, 5
      %v897 = vrot.slane %v896, 4
      %v898 = vrot.slane %v846, 5
      %v899 = vsel %vm895, %v897, %v898
      %v900 = vrot.slane %v898, 4
      %v901 = vrot.slane %v847, 5
      %v902 = vsel %vm895, %v900, %v901
      %v903 = vrot.slane %v848, 5
      %v904 = vrot.slane %v903, 4
      %v905 = vrot.slane %v849, 5
      %v906 = vsel %vm895, %v904, %v905
      %v907 = vrot.slane %v905, 4
      %v908 = vrot.slane %v850, 5
      %v909 = vsel %vm895, %v907, %v908
      %v910 = vrot.slane %v851, 5
      %v911 = vrot.slane %v910, 4
      %v912 = vrot.slane %v852, 5
      %v913 = vsel %vm895, %v911, %v912
      %v914 = vrot.slane %v912, 4
      %v915 = vrot.slane %v853, 5
      %v916 = vsel %vm895, %v914, %v915
      %v917 = vrot.slane %v854, 5
      %v918 = vrot.slane %v917, 4
      %v919 = vrot.slane %v855, 5
      %v920 = vsel %vm895, %v918, %v919
      %v921 = vrot.slane %v919, 4
      %v922 = vrot.slane %v856, 5
      %v923 = vsel %vm895, %v921, %v922
      %v924 = vrot.slane %v857, 5
      %v925 = vrot.slane %v924, 4
      %v926 = vrot.slane %v858, 5
      %v927 = vsel %vm895, %v925, %v926
      %v928 = vrot.slane %v926, 4
      %v929 = vrot.slane %v859, 5
      %v930 = vsel %vm895, %v928, %v929
      %v931 = vrot.slane %v860, 5
      %v932 = vrot.slane %v931, 4
      %v933 = vrot.slane %v861, 5
      %v934 = vsel %vm895, %v932, %v933
      %v935 = vrot.slane %v933, 4
      %v936 = vrot.slane %v862, 5
      %v937 = vsel %vm895, %v935, %v936
      %v938 = vrot.slane %v863, 5
      %v939 = vrot.slane %v938, 4
      %v940 = vrot.slane %v864, 5
      %v941 = vsel %vm895, %v939, %v940
      %v942 = vrot.slane %v940, 4
      %v943 = vrot.slane %v865, 5
      %v944 = vsel %vm895, %v942, %v943
      %v945 = vrot.slane %v866, 5
      %v946 = vrot.slane %v945, 4
      %v947 = vrot.slane %v867, 5
      %v948 = vsel %vm895, %v946, %v947
      %v949 = vrot.slane %v947, 4
      %v950 = vrot.slane %v868, 5
      %v951 = vsel %vm895, %v949, %v950
      %v952 = vld [vmem:[#allocation2] sm:$0xff]
      %v953 = vld [vmem:[#allocation2 + $0x8] sm:$0xff]
      %v954 = vld [vmem:[#allocation2 + $0x10] sm:$0xff]
      %v955 = vld [vmem:[#allocation2 + $0x18] sm:$0xff]
      %v956 = vld [vmem:[#allocation2 + $0x20] sm:$0xff]
      %v957 = vld [vmem:[#allocation2 + $0x28] sm:$0xff]
      %v958 = vld [vmem:[#allocation2 + $0x30] sm:$0xff]
      %v959 = vld [vmem:[#allocation2 + $0x38] sm:$0xff]
      %v960 = vld [vmem:[#allocation2 + $0x40] sm:$0xff]
      %v961 = vld [vmem:[#allocation2 + $0x48] sm:$0xff]
      %v962 = vld [vmem:[#allocation2 + $0x50] sm:$0xff]
      %v963 = vld [vmem:[#allocation2 + $0x58] sm:$0xff]
      %v964 = vld [vmem:[#allocation2 + $0x60] sm:$0xff]
      %v965 = vld [vmem:[#allocation2 + $0x68] sm:$0xff]
      %v966 = vld [vmem:[#allocation2 + $0x70] sm:$0xff]
      %v967 = vld [vmem:[#allocation2 + $0x78] sm:$0xff]
      %s968 = scalar_lea.vmem %s2, 128
      %v969 = vld [vmem:[%s968] sm:$0xf]
      %v970 = vld [vmem:[%s968 + $0x4] sm:$0xf]
      %v971 = vld [vmem:[%s968 + $0x8] sm:$0xf]
      %v972 = vld [vmem:[%s968 + $0xc] sm:$0xf]
      %v973 = vld [vmem:[%s968 + $0x10] sm:$0xf]
      %v974 = vld [vmem:[%s968 + $0x14] sm:$0xf]
      %v975 = vld [vmem:[%s968 + $0x18] sm:$0xf]
      %v976 = vld [vmem:[%s968 + $0x1c] sm:$0xf]
      %v977 = vld [vmem:[%s968 + $0x20] sm:$0xf]
      %v978 = vld [vmem:[%s968 + $0x24] sm:$0xf]
      %v979 = vld [vmem:[%s968 + $0x28] sm:$0xf]
      %v980 = vld [vmem:[%s968 + $0x2c] sm:$0xf]
      %v981 = vld [vmem:[%s968 + $0x30] sm:$0xf]
      %v982 = vld [vmem:[%s968 + $0x34] sm:$0xf]
      %v983 = vld [vmem:[%s968 + $0x38] sm:$0xf]
      %v984 = vld [vmem:[%s968 + $0x3c] sm:$0xf]
      %v985 = vunpack.c.l.b16 %v899
      %v986 = vunpack.c.l.b16 %v902
      %v987 = vunpack.c.l.b16 %v906
      %v988 = vunpack.c.l.b16 %v909
      %v989 = vunpack.c.l.b16 %v913
      %v990 = vunpack.c.l.b16 %v916
      %v991 = vunpack.c.l.b16 %v920
      %v992 = vunpack.c.l.b16 %v923
      %v993 = vunpack.c.l.b16 %v927
      %v994 = vunpack.c.l.b16 %v930
      %v995 = vunpack.c.l.b16 %v934
      %v996 = vunpack.c.l.b16 %v937
      %v997 = vunpack.c.l.b16 %v941
      %v998 = vunpack.c.l.b16 %v944
      %v999 = vunpack.c.l.b16 %v948
      %v1000 = vunpack.c.l.b16 %v951
      %v1001 = vpack.c.b16 %v986, %v985
      %v1002 = vpack.c.b16 %v988, %v987
      %v1003 = vpack.c.b16 %v990, %v989
      %v1004 = vpack.c.b16 %v992, %v991
      %v1005 = vpack.c.b16 %v994, %v993
      %v1006 = vpack.c.b16 %v996, %v995
      %v1007 = vpack.c.b16 %v998, %v997
      %v1008 = vpack.c.b16 %v1000, %v999
      %v1033 = vunpack.c.l.b16 %v969
      %v1034 = vunpack.c.l.b16 %v970
      %v1035 = vunpack.c.l.b16 %v971
      %v1036 = vunpack.c.l.b16 %v972
      %v1037 = vunpack.c.l.b16 %v973
      %v1038 = vunpack.c.l.b16 %v974
      %v1039 = vunpack.c.l.b16 %v975
      %v1040 = vunpack.c.l.b16 %v976
      %v1041 = vunpack.c.l.b16 %v977
      %v1042 = vunpack.c.l.b16 %v978
      %v1043 = vunpack.c.l.b16 %v979
      %v1044 = vunpack.c.l.b16 %v980
      %v1045 = vunpack.c.l.b16 %v981
      %v1046 = vunpack.c.l.b16 %v982
      %v1047 = vunpack.c.l.b16 %v983
      %v1048 = vunpack.c.l.b16 %v984
      %v1049 = vpack.c.b16 %v1034, %v1033
      %v1050 = vpack.c.b16 %v1036, %v1035
      %v1051 = vpack.c.b16 %v1038, %v1037
      %v1052 = vpack.c.b16 %v1040, %v1039
      %v1053 = vpack.c.b16 %v1042, %v1041
      %v1054 = vpack.c.b16 %v1044, %v1043
      %v1055 = vpack.c.b16 %v1046, %v1045
      %v1056 = vpack.c.b16 %v1048, %v1047
      %1065 = vmatpush.bf16.msra.mxu0 %v1056
      %1066 = vmatpush.bf16.msra.mxu0 %v1055
      %1067 = vmatpush.bf16.msra.mxu0 %v1054
      %1068 = vmatpush.bf16.msra.mxu0 %v1053
      %1069 = vmatpush.bf16.msra.mxu0 %v1052
      %1070 = vmatpush.bf16.msra.mxu0 %v1051
      %1071 = vmatpush.bf16.msra.mxu0 %v1050
      %1072 = vmatpush.bf16.msra.mxu0 %v1049
      %1073 = vmatmul.bf16.gmra.mxu0 %v1001
      %v1074 = vpop.f32.mrf.mxu0
      %v1075 = vadd.f32 0.0, %v1074
      %v1076 = vpop.f32.mrf.mxu0
      %v1077 = vadd.f32 0.0, %v1076
      %1078 = vmatmul.bf16.gmra.mxu0 %v1002
      %v1079 = vpop.f32.mrf.mxu0
      %v1080 = vadd.f32 0.0, %v1079
      %v1081 = vpop.f32.mrf.mxu0
      %v1082 = vadd.f32 0.0, %v1081
      %1083 = vmatmul.bf16.gmra.mxu0 %v1003
      %v1084 = vpop.f32.mrf.mxu0
      %v1085 = vadd.f32 0.0, %v1084
      %v1086 = vpop.f32.mrf.mxu0
      %v1087 = vadd.f32 0.0, %v1086
      %1088 = vmatmul.bf16.gmra.mxu0 %v1004
      %v1089 = vpop.f32.mrf.mxu0
      %v1090 = vadd.f32 0.0, %v1089
      %v1091 = vpop.f32.mrf.mxu0
      %v1092 = vadd.f32 0.0, %v1091
      %1093 = vmatmul.bf16.gmra.mxu0 %v1005
      %v1094 = vpop.f32.mrf.mxu0
      %v1095 = vadd.f32 0.0, %v1094
      %v1096 = vpop.f32.mrf.mxu0
      %v1097 = vadd.f32 0.0, %v1096
      %1098 = vmatmul.bf16.gmra.mxu0 %v1006
      %v1099 = vpop.f32.mrf.mxu0
      %v1100 = vadd.f32 0.0, %v1099
      %v1101 = vpop.f32.mrf.mxu0
      %v1102 = vadd.f32 0.0, %v1101
      %1103 = vmatmul.bf16.gmra.mxu0 %v1007
      %v1104 = vpop.f32.mrf.mxu0
      %v1105 = vadd.f32 0.0, %v1104
      %v1106 = vpop.f32.mrf.mxu0
      %v1107 = vadd.f32 0.0, %v1106
      %1108 = vmatmul.bf16.gmra.mxu0 %v1008
      %v1109 = vpop.f32.mrf.mxu0
      %v1110 = vadd.f32 0.0, %v1109
      %v1111 = vpop.f32.mrf.mxu0
      %v1112 = vadd.f32 0.0, %v1111
      %1113 = vdwg.mxu0
      %v1114 = vadd.f32 %v952, %v1075
      %v1115 = vadd.f32 %v953, %v1077
      %v1116 = vadd.f32 %v954, %v1080
      %v1117 = vadd.f32 %v955, %v1082
      %v1118 = vadd.f32 %v956, %v1085
      %v1119 = vadd.f32 %v957, %v1087
      %v1120 = vadd.f32 %v958, %v1090
      %v1121 = vadd.f32 %v959, %v1092
      %v1122 = vadd.f32 %v960, %v1095
      %v1123 = vadd.f32 %v961, %v1097
      %v1124 = vadd.f32 %v962, %v1100
      %v1125 = vadd.f32 %v963, %v1102
      %v1126 = vadd.f32 %v964, %v1105
      %v1127 = vadd.f32 %v965, %v1107
      %v1128 = vadd.f32 %v966, %v1110
      %v1129 = vadd.f32 %v967, %v1112
      %1130 = vst [vmem:[#allocation2] sm:$0xff] %v1114
      %1131 = vst [vmem:[#allocation2 + $0x8] sm:$0xff] %v1115
      %1132 = vst [vmem:[#allocation2 + $0x10] sm:$0xff] %v1116
      %1133 = vst [vmem:[#allocation2 + $0x18] sm:$0xff] %v1117
      %1134 = vst [vmem:[#allocation2 + $0x20] sm:$0xff] %v1118
      %1135 = vst [vmem:[#allocation2 + $0x28] sm:$0xff] %v1119
      %1136 = vst [vmem:[#allocation2 + $0x30] sm:$0xff] %v1120
      %1137 = vst [vmem:[#allocation2 + $0x38] sm:$0xff] %v1121
      %1138 = vst [vmem:[#allocation2 + $0x40] sm:$0xff] %v1122
      %1139 = vst [vmem:[#allocation2 + $0x48] sm:$0xff] %v1123
      %1140 = vst [vmem:[#allocation2 + $0x50] sm:$0xff] %v1124
      %1141 = vst [vmem:[#allocation2 + $0x58] sm:$0xff] %v1125
      %1142 = vst [vmem:[#allocation2 + $0x60] sm:$0xff] %v1126
      %1143 = vst [vmem:[#allocation2 + $0x68] sm:$0xff] %v1127
      %1144 = vst [vmem:[#allocation2 + $0x70] sm:$0xff] %v1128
      %1145 = vst [vmem:[#allocation2 + $0x78] sm:$0xff] %v1129
      %s1146 = scalar_lea.vmem %s180, 12
      %v1147 = vld [vmem:[%s1146] sm:$0xf]
      %v1148 = vld [vmem:[%s1146 + $0x4] sm:$0xf]
      %v1149 = vld [vmem:[%s1146 + $0xc] sm:$0xf]
      %v1150 = vld [vmem:[%s1146 + $0x10] sm:$0xf]
      %v1151 = vld [vmem:[%s1146 + $0x18] sm:$0xf]
      %v1152 = vld [vmem:[%s1146 + $0x1c] sm:$0xf]
      %v1153 = vld [vmem:[%s1146 + $0x24] sm:$0xf]
      %v1154 = vld [vmem:[%s1146 + $0x28] sm:$0xf]
      %v1155 = vld [vmem:[%s1146 + $0x30] sm:$0xf]
      %v1156 = vld [vmem:[%s1146 + $0x34] sm:$0xf]
      %v1157 = vld [vmem:[%s1146 + $0x3c] sm:$0xf]
      %v1158 = vld [vmem:[%s1146 + $0x40] sm:$0xf]
      %v1159 = vld [vmem:[%s1146 + $0x48] sm:$0xf]
      %v1160 = vld [vmem:[%s1146 + $0x4c] sm:$0xf]
      %v1161 = vld [vmem:[%s1146 + $0x54] sm:$0xf]
      %v1162 = vld [vmem:[%s1146 + $0x58] sm:$0xf]
      %v1163 = vld [vmem:[#allocation2] sm:$0xff]
      %v1164 = vld [vmem:[#allocation2 + $0x8] sm:$0xff]
      %v1165 = vld [vmem:[#allocation2 + $0x10] sm:$0xff]
      %v1166 = vld [vmem:[#allocation2 + $0x18] sm:$0xff]
      %v1167 = vld [vmem:[#allocation2 + $0x20] sm:$0xff]
      %v1168 = vld [vmem:[#allocation2 + $0x28] sm:$0xff]
      %v1169 = vld [vmem:[#allocation2 + $0x30] sm:$0xff]
      %v1170 = vld [vmem:[#allocation2 + $0x38] sm:$0xff]
      %v1171 = vld [vmem:[#allocation2 + $0x40] sm:$0xff]
      %v1172 = vld [vmem:[#allocation2 + $0x48] sm:$0xff]
      %v1173 = vld [vmem:[#allocation2 + $0x50] sm:$0xff]
      %v1174 = vld [vmem:[#allocation2 + $0x58] sm:$0xff]
      %v1175 = vld [vmem:[#allocation2 + $0x60] sm:$0xff]
      %v1176 = vld [vmem:[#allocation2 + $0x68] sm:$0xff]
      %v1177 = vld [vmem:[#allocation2 + $0x70] sm:$0xff]
      %v1178 = vld [vmem:[#allocation2 + $0x78] sm:$0xff]
      %s1179 = scalar_lea.vmem %s2, 192
      %v1180 = vld [vmem:[%s1179] sm:$0xf]
      %v1181 = vld [vmem:[%s1179 + $0x4] sm:$0xf]
      %v1182 = vld [vmem:[%s1179 + $0x8] sm:$0xf]
      %v1183 = vld [vmem:[%s1179 + $0xc] sm:$0xf]
      %v1184 = vld [vmem:[%s1179 + $0x10] sm:$0xf]
      %v1185 = vld [vmem:[%s1179 + $0x14] sm:$0xf]
      %v1186 = vld [vmem:[%s1179 + $0x18] sm:$0xf]
      %v1187 = vld [vmem:[%s1179 + $0x1c] sm:$0xf]
      %v1188 = vld [vmem:[%s1179 + $0x20] sm:$0xf]
      %v1189 = vld [vmem:[%s1179 + $0x24] sm:$0xf]
      %v1190 = vld [vmem:[%s1179 + $0x28] sm:$0xf]
      %v1191 = vld [vmem:[%s1179 + $0x2c] sm:$0xf]
      %v1192 = vld [vmem:[%s1179 + $0x30] sm:$0xf]
      %v1193 = vld [vmem:[%s1179 + $0x34] sm:$0xf]
      %v1194 = vld [vmem:[%s1179 + $0x38] sm:$0xf]
      %v1195 = vld [vmem:[%s1179 + $0x3c] sm:$0xf]
      %v1212 = vunpack.c.l.b16 %v1147
      %v1213 = vunpack.c.l.b16 %v1148
      %v1214 = vunpack.c.l.b16 %v1149
      %v1215 = vunpack.c.l.b16 %v1150
      %v1216 = vunpack.c.l.b16 %v1151
      %v1217 = vunpack.c.l.b16 %v1152
      %v1218 = vunpack.c.l.b16 %v1153
      %v1219 = vunpack.c.l.b16 %v1154
      %v1220 = vunpack.c.l.b16 %v1155
      %v1221 = vunpack.c.l.b16 %v1156
      %v1222 = vunpack.c.l.b16 %v1157
      %v1223 = vunpack.c.l.b16 %v1158
      %v1224 = vunpack.c.l.b16 %v1159
      %v1225 = vunpack.c.l.b16 %v1160
      %v1226 = vunpack.c.l.b16 %v1161
      %v1227 = vunpack.c.l.b16 %v1162
      %v1228 = vpack.c.b16 %v1213, %v1212
      %v1229 = vpack.c.b16 %v1215, %v1214
      %v1230 = vpack.c.b16 %v1217, %v1216
      %v1231 = vpack.c.b16 %v1219, %v1218
      %v1232 = vpack.c.b16 %v1221, %v1220
      %v1233 = vpack.c.b16 %v1223, %v1222
      %v1234 = vpack.c.b16 %v1225, %v1224
      %v1235 = vpack.c.b16 %v1227, %v1226
      %v1260 = vunpack.c.l.b16 %v1180
      %v1261 = vunpack.c.l.b16 %v1181
      %v1262 = vunpack.c.l.b16 %v1182
      %v1263 = vunpack.c.l.b16 %v1183
      %v1264 = vunpack.c.l.b16 %v1184
      %v1265 = vunpack.c.l.b16 %v1185
      %v1266 = vunpack.c.l.b16 %v1186
      %v1267 = vunpack.c.l.b16 %v1187
      %v1268 = vunpack.c.l.b16 %v1188
      %v1269 = vunpack.c.l.b16 %v1189
      %v1270 = vunpack.c.l.b16 %v1190
      %v1271 = vunpack.c.l.b16 %v1191
      %v1272 = vunpack.c.l.b16 %v1192
      %v1273 = vunpack.c.l.b16 %v1193
      %v1274 = vunpack.c.l.b16 %v1194
      %v1275 = vunpack.c.l.b16 %v1195
      %v1276 = vpack.c.b16 %v1261, %v1260
      %v1277 = vpack.c.b16 %v1263, %v1262
      %v1278 = vpack.c.b16 %v1265, %v1264
      %v1279 = vpack.c.b16 %v1267, %v1266
      %v1280 = vpack.c.b16 %v1269, %v1268
      %v1281 = vpack.c.b16 %v1271, %v1270
      %v1282 = vpack.c.b16 %v1273, %v1272
      %v1283 = vpack.c.b16 %v1275, %v1274
      %1292 = vmatpush.bf16.msra.mxu0 %v1283
      %1293 = vmatpush.bf16.msra.mxu0 %v1282
      %1294 = vmatpush.bf16.msra.mxu0 %v1281
      %1295 = vmatpush.bf16.msra.mxu0 %v1280
      %1296 = vmatpush.bf16.msra.mxu0 %v1279
      %1297 = vmatpush.bf16.msra.mxu0 %v1278
      %1298 = vmatpush.bf16.msra.mxu0 %v1277
      %1299 = vmatpush.bf16.msra.mxu0 %v1276
      %1300 = vmatmul.bf16.gmra.mxu0 %v1228
      %v1301 = vpop.f32.mrf.mxu0
      %v1302 = vadd.f32 0.0, %v1301
      %v1303 = vpop.f32.mrf.mxu0
      %v1304 = vadd.f32 0.0, %v1303
      %1305 = vmatmul.bf16.gmra.mxu0 %v1229
      %v1306 = vpop.f32.mrf.mxu0
      %v1307 = vadd.f32 0.0, %v1306
      %v1308 = vpop.f32.mrf.mxu0
      %v1309 = vadd.f32 0.0, %v1308
      %1310 = vmatmul.bf16.gmra.mxu0 %v1230
      %v1311 = vpop.f32.mrf.mxu0
      %v1312 = vadd.f32 0.0, %v1311
      %v1313 = vpop.f32.mrf.mxu0
      %v1314 = vadd.f32 0.0, %v1313
      %1315 = vmatmul.bf16.gmra.mxu0 %v1231
      %v1316 = vpop.f32.mrf.mxu0
      %v1317 = vadd.f32 0.0, %v1316
      %v1318 = vpop.f32.mrf.mxu0
      %v1319 = vadd.f32 0.0, %v1318
      %1320 = vmatmul.bf16.gmra.mxu0 %v1232
      %v1321 = vpop.f32.mrf.mxu0
      %v1322 = vadd.f32 0.0, %v1321
      %v1323 = vpop.f32.mrf.mxu0
      %v1324 = vadd.f32 0.0, %v1323
      %1325 = vmatmul.bf16.gmra.mxu0 %v1233
      %v1326 = vpop.f32.mrf.mxu0
      %v1327 = vadd.f32 0.0, %v1326
      %v1328 = vpop.f32.mrf.mxu0
      %v1329 = vadd.f32 0.0, %v1328
      %1330 = vmatmul.bf16.gmra.mxu0 %v1234
      %v1331 = vpop.f32.mrf.mxu0
      %v1332 = vadd.f32 0.0, %v1331
      %v1333 = vpop.f32.mrf.mxu0
      %v1334 = vadd.f32 0.0, %v1333
      %1335 = vmatmul.bf16.gmra.mxu0 %v1235
      %v1336 = vpop.f32.mrf.mxu0
      %v1337 = vadd.f32 0.0, %v1336
      %v1338 = vpop.f32.mrf.mxu0
      %v1339 = vadd.f32 0.0, %v1338
      %1340 = vdwg.mxu0
      %v1341 = vadd.f32 %v1163, %v1302
      %v1342 = vadd.f32 %v1164, %v1304
      %v1343 = vadd.f32 %v1165, %v1307
      %v1344 = vadd.f32 %v1166, %v1309
      %v1345 = vadd.f32 %v1167, %v1312
      %v1346 = vadd.f32 %v1168, %v1314
      %v1347 = vadd.f32 %v1169, %v1317
      %v1348 = vadd.f32 %v1170, %v1319
      %v1349 = vadd.f32 %v1171, %v1322
      %v1350 = vadd.f32 %v1172, %v1324
      %v1351 = vadd.f32 %v1173, %v1327
      %v1352 = vadd.f32 %v1174, %v1329
      %v1353 = vadd.f32 %v1175, %v1332
      %v1354 = vadd.f32 %v1176, %v1334
      %v1355 = vadd.f32 %v1177, %v1337
      %v1356 = vadd.f32 %v1178, %v1339
      %1357 = vst [vmem:[#allocation2] sm:$0xff] %v1341
      %1358 = vst [vmem:[#allocation2 + $0x8] sm:$0xff] %v1342
      %1359 = vst [vmem:[#allocation2 + $0x10] sm:$0xff] %v1343
      %1360 = vst [vmem:[#allocation2 + $0x18] sm:$0xff] %v1344
      %1361 = vst [vmem:[#allocation2 + $0x20] sm:$0xff] %v1345
      %1362 = vst [vmem:[#allocation2 + $0x28] sm:$0xff] %v1346
      %1363 = vst [vmem:[#allocation2 + $0x30] sm:$0xff] %v1347
      %1364 = vst [vmem:[#allocation2 + $0x38] sm:$0xff] %v1348
      %1365 = vst [vmem:[#allocation2 + $0x40] sm:$0xff] %v1349
      %1366 = vst [vmem:[#allocation2 + $0x48] sm:$0xff] %v1350
      %1367 = vst [vmem:[#allocation2 + $0x50] sm:$0xff] %v1351
      %1368 = vst [vmem:[#allocation2 + $0x58] sm:$0xff] %v1352
      %1369 = vst [vmem:[#allocation2 + $0x60] sm:$0xff] %v1353
      %1370 = vst [vmem:[#allocation2 + $0x68] sm:$0xff] %v1354
      %1371 = vst [vmem:[#allocation2 + $0x70] sm:$0xff] %v1355
      %1372 = vst [vmem:[#allocation2 + $0x78] sm:$0xff] %v1356
      %v1373 = vld [vmem:[%s1146] sm:$0xf]
      %v1374 = vld [vmem:[%s1146 + $0x4] sm:$0xf]
      %v1375 = vld [vmem:[%s1146 + $0x8] sm:$0x1]
      %v1376 = vld [vmem:[%s1146 + $0xc] sm:$0xf]
      %v1377 = vld [vmem:[%s1146 + $0x10] sm:$0xf]
      %v1378 = vld [vmem:[%s1146 + $0x14] sm:$0x1]
      %v1379 = vld [vmem:[%s1146 + $0x18] sm:$0xf]
      %v1380 = vld [vmem:[%s1146 + $0x1c] sm:$0xf]
      %v1381 = vld [vmem:[%s1146 + $0x20] sm:$0x1]
      %v1382 = vld [vmem:[%s1146 + $0x24] sm:$0xf]
      %v1383 = vld [vmem:[%s1146 + $0x28] sm:$0xf]
      %v1384 = vld [vmem:[%s1146 + $0x2c] sm:$0x1]
      %v1385 = vld [vmem:[%s1146 + $0x30] sm:$0xf]
      %v1386 = vld [vmem:[%s1146 + $0x34] sm:$0xf]
      %v1387 = vld [vmem:[%s1146 + $0x38] sm:$0x1]
      %v1388 = vld [vmem:[%s1146 + $0x3c] sm:$0xf]
      %v1389 = vld [vmem:[%s1146 + $0x40] sm:$0xf]
      %v1390 = vld [vmem:[%s1146 + $0x44] sm:$0x1]
      %v1391 = vld [vmem:[%s1146 + $0x48] sm:$0xf]
      %v1392 = vld [vmem:[%s1146 + $0x4c] sm:$0xf]
      %v1393 = vld [vmem:[%s1146 + $0x50] sm:$0x1]
      %v1394 = vld [vmem:[%s1146 + $0x54] sm:$0xf]
      %v1395 = vld [vmem:[%s1146 + $0x58] sm:$0xf]
      %v1396 = vld [vmem:[%s1146 + $0x5c] sm:$0x1]
      %v1398 = vshrl.u32 %v1373, 16
      %v1400 = vrot.slane %v1398, 4
      %v1401 = vshll.u32 %v1373, 16
      %v1403 = vrot.slane %v1401, 5
      %v1404 = vor.u32 %v1400, %v1403
      %v1405 = vrot.slane %v1404, 4
      %v1407 = vshll.u32 %v1374, 16
      %v1409 = vrot.slane %v1407, 5
      %v1410 = vsel %vm458, %v1405, %v1409
      %v1411 = vshrl.u32 %v1374, 16
      %v1413 = vrot.slane %v1411, 4
      %v1414 = vor.u32 %v1413, %v1409
      %v1415 = vrot.slane %v1414, 4
      %v1417 = vshll.u32 %v1375, 16
      %v1419 = vrot.slane %v1417, 5
      %v1420 = vsel %vm458, %v1415, %v1419
      %v1422 = vshrl.u32 %v1376, 16
      %v1424 = vrot.slane %v1422, 4
      %v1425 = vshll.u32 %v1376, 16
      %v1427 = vrot.slane %v1425, 5
      %v1428 = vor.u32 %v1424, %v1427
      %v1429 = vrot.slane %v1428, 4
      %v1431 = vshll.u32 %v1377, 16
      %v1433 = vrot.slane %v1431, 5
      %v1434 = vsel %vm458, %v1429, %v1433
      %v1435 = vshrl.u32 %v1377, 16
      %v1437 = vrot.slane %v1435, 4
      %v1438 = vor.u32 %v1437, %v1433
      %v1439 = vrot.slane %v1438, 4
      %v1441 = vshll.u32 %v1378, 16
      %v1443 = vrot.slane %v1441, 5
      %v1444 = vsel %vm458, %v1439, %v1443
      %v1446 = vshrl.u32 %v1379, 16
      %v1448 = vrot.slane %v1446, 4
      %v1449 = vshll.u32 %v1379, 16
      %v1451 = vrot.slane %v1449, 5
      %v1452 = vor.u32 %v1448, %v1451
      %v1453 = vrot.slane %v1452, 4
      %v1455 = vshll.u32 %v1380, 16
      %v1457 = vrot.slane %v1455, 5
      %v1458 = vsel %vm458, %v1453, %v1457
      %v1459 = vshrl.u32 %v1380, 16
      %v1461 = vrot.slane %v1459, 4
      %v1462 = vor.u32 %v1461, %v1457
      %v1463 = vrot.slane %v1462, 4
      %v1465 = vshll.u32 %v1381, 16
      %v1467 = vrot.slane %v1465, 5
      %v1468 = vsel %vm458, %v1463, %v1467
      %v1470 = vshrl.u32 %v1382, 16
      %v1472 = vrot.slane %v1470, 4
      %v1473 = vshll.u32 %v1382, 16
      %v1475 = vrot.slane %v1473, 5
      %v1476 = vor.u32 %v1472, %v1475
      %v1477 = vrot.slane %v1476, 4
      %v1479 = vshll.u32 %v1383, 16
      %v1481 = vrot.slane %v1479, 5
      %v1482 = vsel %vm458, %v1477, %v1481
      %v1483 = vshrl.u32 %v1383, 16
      %v1485 = vrot.slane %v1483, 4
      %v1486 = vor.u32 %v1485, %v1481
      %v1487 = vrot.slane %v1486, 4
      %v1489 = vshll.u32 %v1384, 16
      %v1491 = vrot.slane %v1489, 5
      %v1492 = vsel %vm458, %v1487, %v1491
      %v1494 = vshrl.u32 %v1385, 16
      %v1496 = vrot.slane %v1494, 4
      %v1497 = vshll.u32 %v1385, 16
      %v1499 = vrot.slane %v1497, 5
      %v1500 = vor.u32 %v1496, %v1499
      %v1501 = vrot.slane %v1500, 4
      %v1503 = vshll.u32 %v1386, 16
      %v1505 = vrot.slane %v1503, 5
      %v1506 = vsel %vm458, %v1501, %v1505
      %v1507 = vshrl.u32 %v1386, 16
      %v1509 = vrot.slane %v1507, 4
      %v1510 = vor.u32 %v1509, %v1505
      %v1511 = vrot.slane %v1510, 4
      %v1513 = vshll.u32 %v1387, 16
      %v1515 = vrot.slane %v1513, 5
      %v1516 = vsel %vm458, %v1511, %v1515
      %v1518 = vshrl.u32 %v1388, 16
      %v1520 = vrot.slane %v1518, 4
      %v1521 = vshll.u32 %v1388, 16
      %v1523 = vrot.slane %v1521, 5
      %v1524 = vor.u32 %v1520, %v1523
      %v1525 = vrot.slane %v1524, 4
      %v1527 = vshll.u32 %v1389, 16
      %v1529 = vrot.slane %v1527, 5
      %v1530 = vsel %vm458, %v1525, %v1529
      %v1531 = vshrl.u32 %v1389, 16
      %v1533 = vrot.slane %v1531, 4
      %v1534 = vor.u32 %v1533, %v1529
      %v1535 = vrot.slane %v1534, 4
      %v1537 = vshll.u32 %v1390, 16
      %v1539 = vrot.slane %v1537, 5
      %v1540 = vsel %vm458, %v1535, %v1539
      %v1542 = vshrl.u32 %v1391, 16
      %v1544 = vrot.slane %v1542, 4
      %v1545 = vshll.u32 %v1391, 16
      %v1547 = vrot.slane %v1545, 5
      %v1548 = vor.u32 %v1544, %v1547
      %v1549 = vrot.slane %v1548, 4
      %v1551 = vshll.u32 %v1392, 16
      %v1553 = vrot.slane %v1551, 5
      %v1554 = vsel %vm458, %v1549, %v1553
      %v1555 = vshrl.u32 %v1392, 16
      %v1557 = vrot.slane %v1555, 4
      %v1558 = vor.u32 %v1557, %v1553
      %v1559 = vrot.slane %v1558, 4
      %v1561 = vshll.u32 %v1393, 16
      %v1563 = vrot.slane %v1561, 5
      %v1564 = vsel %vm458, %v1559, %v1563
      %v1566 = vshrl.u32 %v1394, 16
      %v1568 = vrot.slane %v1566, 4
      %v1569 = vshll.u32 %v1394, 16
      %v1571 = vrot.slane %v1569, 5
      %v1572 = vor.u32 %v1568, %v1571
      %v1573 = vrot.slane %v1572, 4
      %v1575 = vshll.u32 %v1395, 16
      %v1577 = vrot.slane %v1575, 5
      %v1578 = vsel %vm458, %v1573, %v1577
      %v1579 = vshrl.u32 %v1395, 16
      %v1581 = vrot.slane %v1579, 4
      %v1582 = vor.u32 %v1581, %v1577
      %v1583 = vrot.slane %v1582, 4
      %v1585 = vshll.u32 %v1396, 16
      %v1587 = vrot.slane %v1585, 5
      %v1588 = vsel %vm458, %v1583, %v1587
      %v1589 = vld [vmem:[#allocation2] sm:$0xff]
      %v1590 = vld [vmem:[#allocation2 + $0x8] sm:$0xff]
      %v1591 = vld [vmem:[#allocation2 + $0x10] sm:$0xff]
      %v1592 = vld [vmem:[#allocation2 + $0x18] sm:$0xff]
      %v1593 = vld [vmem:[#allocation2 + $0x20] sm:$0xff]
      %v1594 = vld [vmem:[#allocation2 + $0x28] sm:$0xff]
      %v1595 = vld [vmem:[#allocation2 + $0x30] sm:$0xff]
      %v1596 = vld [vmem:[#allocation2 + $0x38] sm:$0xff]
      %v1597 = vld [vmem:[#allocation2 + $0x40] sm:$0xff]
      %v1598 = vld [vmem:[#allocation2 + $0x48] sm:$0xff]
      %v1599 = vld [vmem:[#allocation2 + $0x50] sm:$0xff]
      %v1600 = vld [vmem:[#allocation2 + $0x58] sm:$0xff]
      %v1601 = vld [vmem:[#allocation2 + $0x60] sm:$0xff]
      %v1602 = vld [vmem:[#allocation2 + $0x68] sm:$0xff]
      %v1603 = vld [vmem:[#allocation2 + $0x70] sm:$0xff]
      %v1604 = vld [vmem:[#allocation2 + $0x78] sm:$0xff]
      %s1605 = scalar_lea.vmem %s2, 256
      %v1606 = vld [vmem:[%s1605] sm:$0xf]
      %v1607 = vld [vmem:[%s1605 + $0x4] sm:$0xf]
      %v1608 = vld [vmem:[%s1605 + $0x8] sm:$0xf]
      %v1609 = vld [vmem:[%s1605 + $0xc] sm:$0xf]
      %v1610 = vld [vmem:[%s1605 + $0x10] sm:$0xf]
      %v1611 = vld [vmem:[%s1605 + $0x14] sm:$0xf]
      %v1612 = vld [vmem:[%s1605 + $0x18] sm:$0xf]
      %v1613 = vld [vmem:[%s1605 + $0x1c] sm:$0xf]
      %v1614 = vld [vmem:[%s1605 + $0x20] sm:$0xf]
      %v1615 = vld [vmem:[%s1605 + $0x24] sm:$0xf]
      %v1616 = vld [vmem:[%s1605 + $0x28] sm:$0xf]
      %v1617 = vld [vmem:[%s1605 + $0x2c] sm:$0xf]
      %v1618 = vld [vmem:[%s1605 + $0x30] sm:$0xf]
      %v1619 = vld [vmem:[%s1605 + $0x34] sm:$0xf]
      %v1620 = vld [vmem:[%s1605 + $0x38] sm:$0xf]
      %v1621 = vld [vmem:[%s1605 + $0x3c] sm:$0xf]
      %v1622 = vunpack.c.l.b16 %v1410
      %v1623 = vunpack.c.l.b16 %v1420
      %v1624 = vunpack.c.l.b16 %v1434
      %v1625 = vunpack.c.l.b16 %v1444
      %v1626 = vunpack.c.l.b16 %v1458
      %v1627 = vunpack.c.l.b16 %v1468
      %v1628 = vunpack.c.l.b16 %v1482
      %v1629 = vunpack.c.l.b16 %v1492
      %v1630 = vunpack.c.l.b16 %v1506
      %v1631 = vunpack.c.l.b16 %v1516
      %v1632 = vunpack.c.l.b16 %v1530
      %v1633 = vunpack.c.l.b16 %v1540
      %v1634 = vunpack.c.l.b16 %v1554
      %v1635 = vunpack.c.l.b16 %v1564
      %v1636 = vunpack.c.l.b16 %v1578
      %v1637 = vunpack.c.l.b16 %v1588
      %v1638 = vpack.c.b16 %v1623, %v1622
      %v1639 = vpack.c.b16 %v1625, %v1624
      %v1640 = vpack.c.b16 %v1627, %v1626
      %v1641 = vpack.c.b16 %v1629, %v1628
      %v1642 = vpack.c.b16 %v1631, %v1630
      %v1643 = vpack.c.b16 %v1633, %v1632
      %v1644 = vpack.c.b16 %v1635, %v1634
      %v1645 = vpack.c.b16 %v1637, %v1636
      %v1670 = vunpack.c.l.b16 %v1606
      %v1671 = vunpack.c.l.b16 %v1607
      %v1672 = vunpack.c.l.b16 %v1608
      %v1673 = vunpack.c.l.b16 %v1609
      %v1674 = vunpack.c.l.b16 %v1610
      %v1675 = vunpack.c.l.b16 %v1611
      %v1676 = vunpack.c.l.b16 %v1612
      %v1677 = vunpack.c.l.b16 %v1613
      %v1678 = vunpack.c.l.b16 %v1614
      %v1679 = vunpack.c.l.b16 %v1615
      %v1680 = vunpack.c.l.b16 %v1616
      %v1681 = vunpack.c.l.b16 %v1617
      %v1682 = vunpack.c.l.b16 %v1618
      %v1683 = vunpack.c.l.b16 %v1619
      %v1684 = vunpack.c.l.b16 %v1620
      %v1685 = vunpack.c.l.b16 %v1621
      %v1686 = vpack.c.b16 %v1671, %v1670
      %v1687 = vpack.c.b16 %v1673, %v1672
      %v1688 = vpack.c.b16 %v1675, %v1674
      %v1689 = vpack.c.b16 %v1677, %v1676
      %v1690 = vpack.c.b16 %v1679, %v1678
      %v1691 = vpack.c.b16 %v1681, %v1680
      %v1692 = vpack.c.b16 %v1683, %v1682
      %v1693 = vpack.c.b16 %v1685, %v1684
      %1702 = vmatpush.bf16.msra.mxu0 %v1693
      %1703 = vmatpush.bf16.msra.mxu0 %v1692
      %1704 = vmatpush.bf16.msra.mxu0 %v1691
      %1705 = vmatpush.bf16.msra.mxu0 %v1690
      %1706 = vmatpush.bf16.msra.mxu0 %v1689
      %1707 = vmatpush.bf16.msra.mxu0 %v1688
      %1708 = vmatpush.bf16.msra.mxu0 %v1687
      %1709 = vmatpush.bf16.msra.mxu0 %v1686
      %1710 = vmatmul.bf16.gmra.mxu0 %v1638
      %v1711 = vpop.f32.mrf.mxu0
      %v1712 = vadd.f32 0.0, %v1711
      %v1713 = vpop.f32.mrf.mxu0
      %v1714 = vadd.f32 0.0, %v1713
      %1715 = vmatmul.bf16.gmra.mxu0 %v1639
      %v1716 = vpop.f32.mrf.mxu0
      %v1717 = vadd.f32 0.0, %v1716
      %v1718 = vpop.f32.mrf.mxu0
      %v1719 = vadd.f32 0.0, %v1718
      %1720 = vmatmul.bf16.gmra.mxu0 %v1640
      %v1721 = vpop.f32.mrf.mxu0
      %v1722 = vadd.f32 0.0, %v1721
      %v1723 = vpop.f32.mrf.mxu0
      %v1724 = vadd.f32 0.0, %v1723
      %1725 = vmatmul.bf16.gmra.mxu0 %v1641
      %v1726 = vpop.f32.mrf.mxu0
      %v1727 = vadd.f32 0.0, %v1726
      %v1728 = vpop.f32.mrf.mxu0
      %v1729 = vadd.f32 0.0, %v1728
      %1730 = vmatmul.bf16.gmra.mxu0 %v1642
      %v1731 = vpop.f32.mrf.mxu0
      %v1732 = vadd.f32 0.0, %v1731
      %v1733 = vpop.f32.mrf.mxu0
      %v1734 = vadd.f32 0.0, %v1733
      %1735 = vmatmul.bf16.gmra.mxu0 %v1643
      %v1736 = vpop.f32.mrf.mxu0
      %v1737 = vadd.f32 0.0, %v1736
      %v1738 = vpop.f32.mrf.mxu0
      %v1739 = vadd.f32 0.0, %v1738
      %1740 = vmatmul.bf16.gmra.mxu0 %v1644
      %v1741 = vpop.f32.mrf.mxu0
      %v1742 = vadd.f32 0.0, %v1741
      %v1743 = vpop.f32.mrf.mxu0
      %v1744 = vadd.f32 0.0, %v1743
      %1745 = vmatmul.bf16.gmra.mxu0 %v1645
      %v1746 = vpop.f32.mrf.mxu0
      %v1747 = vadd.f32 0.0, %v1746
      %v1748 = vpop.f32.mrf.mxu0
      %v1749 = vadd.f32 0.0, %v1748
      %1750 = vdwg.mxu0
      %v1751 = vadd.f32 %v1589, %v1712
      %v1752 = vadd.f32 %v1590, %v1714
      %v1753 = vadd.f32 %v1591, %v1717
      %v1754 = vadd.f32 %v1592, %v1719
      %v1755 = vadd.f32 %v1593, %v1722
      %v1756 = vadd.f32 %v1594, %v1724
      %v1757 = vadd.f32 %v1595, %v1727
      %v1758 = vadd.f32 %v1596, %v1729
      %v1759 = vadd.f32 %v1597, %v1732
      %v1760 = vadd.f32 %v1598, %v1734
      %v1761 = vadd.f32 %v1599, %v1737
      %v1762 = vadd.f32 %v1600, %v1739
      %v1763 = vadd.f32 %v1601, %v1742
      %v1764 = vadd.f32 %v1602, %v1744
      %v1765 = vadd.f32 %v1603, %v1747
      %v1766 = vadd.f32 %v1604, %v1749
      %1767 = vst [vmem:[#allocation2] sm:$0xff] %v1751
      %1768 = vst [vmem:[#allocation2 + $0x8] sm:$0xff] %v1752
      %1769 = vst [vmem:[#allocation2 + $0x10] sm:$0xff] %v1753
      %1770 = vst [vmem:[#allocation2 + $0x18] sm:$0xff] %v1754
      %1771 = vst [vmem:[#allocation2 + $0x20] sm:$0xff] %v1755
      %1772 = vst [vmem:[#allocation2 + $0x28] sm:$0xff] %v1756
      %1773 = vst [vmem:[#allocation2 + $0x30] sm:$0xff] %v1757
      %1774 = vst [vmem:[#allocation2 + $0x38] sm:$0xff] %v1758
      %1775 = vst [vmem:[#allocation2 + $0x40] sm:$0xff] %v1759
      %1776 = vst [vmem:[#allocation2 + $0x48] sm:$0xff] %v1760
      %1777 = vst [vmem:[#allocation2 + $0x50] sm:$0xff] %v1761
      %1778 = vst [vmem:[#allocation2 + $0x58] sm:$0xff] %v1762
      %1779 = vst [vmem:[#allocation2 + $0x60] sm:$0xff] %v1763
      %1780 = vst [vmem:[#allocation2 + $0x68] sm:$0xff] %v1764
      %1781 = vst [vmem:[#allocation2 + $0x70] sm:$0xff] %v1765
      %1782 = vst [vmem:[#allocation2 + $0x78] sm:$0xff] %v1766
      %v1783 = vld [vmem:[%s1146] sm:$0xe]
      %v1784 = vld [vmem:[%s1146 + $0x4] sm:$0xf]
      %v1785 = vld [vmem:[%s1146 + $0x8] sm:$0x1]
      %v1786 = vld [vmem:[%s1146 + $0xc] sm:$0xe]
      %v1787 = vld [vmem:[%s1146 + $0x10] sm:$0xf]
      %v1788 = vld [vmem:[%s1146 + $0x14] sm:$0x1]
      %v1789 = vld [vmem:[%s1146 + $0x18] sm:$0xe]
      %v1790 = vld [vmem:[%s1146 + $0x1c] sm:$0xf]
      %v1791 = vld [vmem:[%s1146 + $0x20] sm:$0x1]
      %v1792 = vld [vmem:[%s1146 + $0x24] sm:$0xe]
      %v1793 = vld [vmem:[%s1146 + $0x28] sm:$0xf]
      %v1794 = vld [vmem:[%s1146 + $0x2c] sm:$0x1]
      %v1795 = vld [vmem:[%s1146 + $0x30] sm:$0xe]
      %v1796 = vld [vmem:[%s1146 + $0x34] sm:$0xf]
      %v1797 = vld [vmem:[%s1146 + $0x38] sm:$0x1]
      %v1798 = vld [vmem:[%s1146 + $0x3c] sm:$0xe]
      %v1799 = vld [vmem:[%s1146 + $0x40] sm:$0xf]
      %v1800 = vld [vmem:[%s1146 + $0x44] sm:$0x1]
      %v1801 = vld [vmem:[%s1146 + $0x48] sm:$0xe]
      %v1802 = vld [vmem:[%s1146 + $0x4c] sm:$0xf]
      %v1803 = vld [vmem:[%s1146 + $0x50] sm:$0x1]
      %v1804 = vld [vmem:[%s1146 + $0x54] sm:$0xe]
      %v1805 = vld [vmem:[%s1146 + $0x58] sm:$0xf]
      %v1806 = vld [vmem:[%s1146 + $0x5c] sm:$0x1]
      %v1831 = vrot.slane %v1783, 5
      %v1832 = vrot.slane %v1831, 4
      %v1833 = vrot.slane %v1784, 5
      %v1834 = vsel %vm895, %v1832, %v1833
      %v1835 = vrot.slane %v1833, 4
      %v1836 = vrot.slane %v1785, 5
      %v1837 = vsel %vm895, %v1835, %v1836
      %v1838 = vrot.slane %v1786, 5
      %v1839 = vrot.slane %v1838, 4
      %v1840 = vrot.slane %v1787, 5
      %v1841 = vsel %vm895, %v1839, %v1840
      %v1842 = vrot.slane %v1840, 4
      %v1843 = vrot.slane %v1788, 5
      %v1844 = vsel %vm895, %v1842, %v1843
      %v1845 = vrot.slane %v1789, 5
      %v1846 = vrot.slane %v1845, 4
      %v1847 = vrot.slane %v1790, 5
      %v1848 = vsel %vm895, %v1846, %v1847
      %v1849 = vrot.slane %v1847, 4
      %v1850 = vrot.slane %v1791, 5
      %v1851 = vsel %vm895, %v1849, %v1850
      %v1852 = vrot.slane %v1792, 5
      %v1853 = vrot.slane %v1852, 4
      %v1854 = vrot.slane %v1793, 5
      %v1855 = vsel %vm895, %v1853, %v1854
      %v1856 = vrot.slane %v1854, 4
      %v1857 = vrot.slane %v1794, 5
      %v1858 = vsel %vm895, %v1856, %v1857
      %v1859 = vrot.slane %v1795, 5
      %v1860 = vrot.slane %v1859, 4
      %v1861 = vrot.slane %v1796, 5
      %v1862 = vsel %vm895, %v1860, %v1861
      %v1863 = vrot.slane %v1861, 4
      %v1864 = vrot.slane %v1797, 5
      %v1865 = vsel %vm895, %v1863, %v1864
      %v1866 = vrot.slane %v1798, 5
      %v1867 = vrot.slane %v1866, 4
      %v1868 = vrot.slane %v1799, 5
      %v1869 = vsel %vm895, %v1867, %v1868
      %v1870 = vrot.slane %v1868, 4
      %v1871 = vrot.slane %v1800, 5
      %v1872 = vsel %vm895, %v1870, %v1871
      %v1873 = vrot.slane %v1801, 5
      %v1874 = vrot.slane %v1873, 4
      %v1875 = vrot.slane %v1802, 5
      %v1876 = vsel %vm895, %v1874, %v1875
      %v1877 = vrot.slane %v1875, 4
      %v1878 = vrot.slane %v1803, 5
      %v1879 = vsel %vm895, %v1877, %v1878
      %v1880 = vrot.slane %v1804, 5
      %v1881 = vrot.slane %v1880, 4
      %v1882 = vrot.slane %v1805, 5
      %v1883 = vsel %vm895, %v1881, %v1882
      %v1884 = vrot.slane %v1882, 4
      %v1885 = vrot.slane %v1806, 5
      %v1886 = vsel %vm895, %v1884, %v1885
      %v1887 = vld [vmem:[#allocation2] sm:$0xff]
      %v1888 = vld [vmem:[#allocation2 + $0x8] sm:$0xff]
      %v1889 = vld [vmem:[#allocation2 + $0x10] sm:$0xff]
      %v1890 = vld [vmem:[#allocation2 + $0x18] sm:$0xff]
      %v1891 = vld [vmem:[#allocation2 + $0x20] sm:$0xff]
      %v1892 = vld [vmem:[#allocation2 + $0x28] sm:$0xff]
      %v1893 = vld [vmem:[#allocation2 + $0x30] sm:$0xff]
      %v1894 = vld [vmem:[#allocation2 + $0x38] sm:$0xff]
      %v1895 = vld [vmem:[#allocation2 + $0x40] sm:$0xff]
      %v1896 = vld [vmem:[#allocation2 + $0x48] sm:$0xff]
      %v1897 = vld [vmem:[#allocation2 + $0x50] sm:$0xff]
      %v1898 = vld [vmem:[#allocation2 + $0x58] sm:$0xff]
      %v1899 = vld [vmem:[#allocation2 + $0x60] sm:$0xff]
      %v1900 = vld [vmem:[#allocation2 + $0x68] sm:$0xff]
      %v1901 = vld [vmem:[#allocation2 + $0x70] sm:$0xff]
      %v1902 = vld [vmem:[#allocation2 + $0x78] sm:$0xff]
      %s1903 = scalar_lea.vmem %s2, 320
      %v1904 = vld [vmem:[%s1903] sm:$0xf]
      %v1905 = vld [vmem:[%s1903 + $0x4] sm:$0xf]
      %v1906 = vld [vmem:[%s1903 + $0x8] sm:$0xf]
      %v1907 = vld [vmem:[%s1903 + $0xc] sm:$0xf]
      %v1908 = vld [vmem:[%s1903 + $0x10] sm:$0xf]
      %v1909 = vld [vmem:[%s1903 + $0x14] sm:$0xf]
      %v1910 = vld [vmem:[%s1903 + $0x18] sm:$0xf]
      %v1911 = vld [vmem:[%s1903 + $0x1c] sm:$0xf]
      %v1912 = vld [vmem:[%s1903 + $0x20] sm:$0xf]
      %v1913 = vld [vmem:[%s1903 + $0x24] sm:$0xf]
      %v1914 = vld [vmem:[%s1903 + $0x28] sm:$0xf]
      %v1915 = vld [vmem:[%s1903 + $0x2c] sm:$0xf]
      %v1916 = vld [vmem:[%s1903 + $0x30] sm:$0xf]
      %v1917 = vld [vmem:[%s1903 + $0x34] sm:$0xf]
      %v1918 = vld [vmem:[%s1903 + $0x38] sm:$0xf]
      %v1919 = vld [vmem:[%s1903 + $0x3c] sm:$0xf]
      %v1920 = vunpack.c.l.b16 %v1834
      %v1921 = vunpack.c.l.b16 %v1837
      %v1922 = vunpack.c.l.b16 %v1841
      %v1923 = vunpack.c.l.b16 %v1844
      %v1924 = vunpack.c.l.b16 %v1848
      %v1925 = vunpack.c.l.b16 %v1851
      %v1926 = vunpack.c.l.b16 %v1855
      %v1927 = vunpack.c.l.b16 %v1858
      %v1928 = vunpack.c.l.b16 %v1862
      %v1929 = vunpack.c.l.b16 %v1865
      %v1930 = vunpack.c.l.b16 %v1869
      %v1931 = vunpack.c.l.b16 %v1872
      %v1932 = vunpack.c.l.b16 %v1876
      %v1933 = vunpack.c.l.b16 %v1879
      %v1934 = vunpack.c.l.b16 %v1883
      %v1935 = vunpack.c.l.b16 %v1886
      %v1936 = vpack.c.b16 %v1921, %v1920
      %v1937 = vpack.c.b16 %v1923, %v1922
      %v1938 = vpack.c.b16 %v1925, %v1924
      %v1939 = vpack.c.b16 %v1927, %v1926
      %v1940 = vpack.c.b16 %v1929, %v1928
      %v1941 = vpack.c.b16 %v1931, %v1930
      %v1942 = vpack.c.b16 %v1933, %v1932
      %v1943 = vpack.c.b16 %v1935, %v1934
      %v1968 = vunpack.c.l.b16 %v1904
      %v1969 = vunpack.c.l.b16 %v1905
      %v1970 = vunpack.c.l.b16 %v1906
      %v1971 = vunpack.c.l.b16 %v1907
      %v1972 = vunpack.c.l.b16 %v1908
      %v1973 = vunpack.c.l.b16 %v1909
      %v1974 = vunpack.c.l.b16 %v1910
      %v1975 = vunpack.c.l.b16 %v1911
      %v1976 = vunpack.c.l.b16 %v1912
      %v1977 = vunpack.c.l.b16 %v1913
      %v1978 = vunpack.c.l.b16 %v1914
      %v1979 = vunpack.c.l.b16 %v1915
      %v1980 = vunpack.c.l.b16 %v1916
      %v1981 = vunpack.c.l.b16 %v1917
      %v1982 = vunpack.c.l.b16 %v1918
      %v1983 = vunpack.c.l.b16 %v1919
      %v1984 = vpack.c.b16 %v1969, %v1968
      %v1985 = vpack.c.b16 %v1971, %v1970
      %v1986 = vpack.c.b16 %v1973, %v1972
      %v1987 = vpack.c.b16 %v1975, %v1974
      %v1988 = vpack.c.b16 %v1977, %v1976
      %v1989 = vpack.c.b16 %v1979, %v1978
      %v1990 = vpack.c.b16 %v1981, %v1980
      %v1991 = vpack.c.b16 %v1983, %v1982
      %2000 = vmatpush.bf16.msra.mxu0 %v1991
      %2001 = vmatpush.bf16.msra.mxu0 %v1990
      %2002 = vmatpush.bf16.msra.mxu0 %v1989
      %2003 = vmatpush.bf16.msra.mxu0 %v1988
      %2004 = vmatpush.bf16.msra.mxu0 %v1987
      %2005 = vmatpush.bf16.msra.mxu0 %v1986
      %2006 = vmatpush.bf16.msra.mxu0 %v1985
      %2007 = vmatpush.bf16.msra.mxu0 %v1984
      %2008 = vmatmul.bf16.gmra.mxu0 %v1936
      %v2009 = vpop.f32.mrf.mxu0
      %v2010 = vadd.f32 0.0, %v2009
      %v2011 = vpop.f32.mrf.mxu0
      %v2012 = vadd.f32 0.0, %v2011
      %2013 = vmatmul.bf16.gmra.mxu0 %v1937
      %v2014 = vpop.f32.mrf.mxu0
      %v2015 = vadd.f32 0.0, %v2014
      %v2016 = vpop.f32.mrf.mxu0
      %v2017 = vadd.f32 0.0, %v2016
      %2018 = vmatmul.bf16.gmra.mxu0 %v1938
      %v2019 = vpop.f32.mrf.mxu0
      %v2020 = vadd.f32 0.0, %v2019
      %v2021 = vpop.f32.mrf.mxu0
      %v2022 = vadd.f32 0.0, %v2021
      %2023 = vmatmul.bf16.gmra.mxu0 %v1939
      %v2024 = vpop.f32.mrf.mxu0
      %v2025 = vadd.f32 0.0, %v2024
      %v2026 = vpop.f32.mrf.mxu0
      %v2027 = vadd.f32 0.0, %v2026
      %2028 = vmatmul.bf16.gmra.mxu0 %v1940
      %v2029 = vpop.f32.mrf.mxu0
      %v2030 = vadd.f32 0.0, %v2029
      %v2031 = vpop.f32.mrf.mxu0
      %v2032 = vadd.f32 0.0, %v2031
      %2033 = vmatmul.bf16.gmra.mxu0 %v1941
      %v2034 = vpop.f32.mrf.mxu0
      %v2035 = vadd.f32 0.0, %v2034
      %v2036 = vpop.f32.mrf.mxu0
      %v2037 = vadd.f32 0.0, %v2036
      %2038 = vmatmul.bf16.gmra.mxu0 %v1942
      %v2039 = vpop.f32.mrf.mxu0
      %v2040 = vadd.f32 0.0, %v2039
      %v2041 = vpop.f32.mrf.mxu0
      %v2042 = vadd.f32 0.0, %v2041
      %2043 = vmatmul.bf16.gmra.mxu0 %v1943
      %v2044 = vpop.f32.mrf.mxu0
      %v2045 = vadd.f32 0.0, %v2044
      %v2046 = vpop.f32.mrf.mxu0
      %v2047 = vadd.f32 0.0, %v2046
      %2048 = vdwg.mxu0
      %v2049 = vadd.f32 %v1887, %v2010
      %v2050 = vadd.f32 %v1888, %v2012
      %v2051 = vadd.f32 %v1889, %v2015
      %v2052 = vadd.f32 %v1890, %v2017
      %v2053 = vadd.f32 %v1891, %v2020
      %v2054 = vadd.f32 %v1892, %v2022
      %v2055 = vadd.f32 %v1893, %v2025
      %v2056 = vadd.f32 %v1894, %v2027
      %v2057 = vadd.f32 %v1895, %v2030
      %v2058 = vadd.f32 %v1896, %v2032
      %v2059 = vadd.f32 %v1897, %v2035
      %v2060 = vadd.f32 %v1898, %v2037
      %v2061 = vadd.f32 %v1899, %v2040
      %v2062 = vadd.f32 %v1900, %v2042
      %v2063 = vadd.f32 %v1901, %v2045
      %v2064 = vadd.f32 %v1902, %v2047
      %2065 = vst [vmem:[#allocation2] sm:$0xff] %v2049
      %2066 = vst [vmem:[#allocation2 + $0x8] sm:$0xff] %v2050
      %2067 = vst [vmem:[#allocation2 + $0x10] sm:$0xff] %v2051
      %2068 = vst [vmem:[#allocation2 + $0x18] sm:$0xff] %v2052
      %2069 = vst [vmem:[#allocation2 + $0x20] sm:$0xff] %v2053
      %2070 = vst [vmem:[#allocation2 + $0x28] sm:$0xff] %v2054
      %2071 = vst [vmem:[#allocation2 + $0x30] sm:$0xff] %v2055
      %2072 = vst [vmem:[#allocation2 + $0x38] sm:$0xff] %v2056
      %2073 = vst [vmem:[#allocation2 + $0x40] sm:$0xff] %v2057
      %2074 = vst [vmem:[#allocation2 + $0x48] sm:$0xff] %v2058
      %2075 = vst [vmem:[#allocation2 + $0x50] sm:$0xff] %v2059
      %2076 = vst [vmem:[#allocation2 + $0x58] sm:$0xff] %v2060
      %2077 = vst [vmem:[#allocation2 + $0x60] sm:$0xff] %v2061
      %2078 = vst [vmem:[#allocation2 + $0x68] sm:$0xff] %v2062
      %2079 = vst [vmem:[#allocation2 + $0x70] sm:$0xff] %v2063
      %2080 = vst [vmem:[#allocation2 + $0x78] sm:$0xff] %v2064
      %s2081 = scalar_lea.vmem %s180, 24
      %v2082 = vld [vmem:[%s2081] sm:$0xf]
      %v2083 = vld [vmem:[%s2081 + $0x4] sm:$0xf]
      %v2084 = vld [vmem:[%s2081 + $0xc] sm:$0xf]
      %v2085 = vld [vmem:[%s2081 + $0x10] sm:$0xf]
      %v2086 = vld [vmem:[%s2081 + $0x18] sm:$0xf]
      %v2087 = vld [vmem:[%s2081 + $0x1c] sm:$0xf]
      %v2088 = vld [vmem:[%s2081 + $0x24] sm:$0xf]
      %v2089 = vld [vmem:[%s2081 + $0x28] sm:$0xf]
      %v2090 = vld [vmem:[%s2081 + $0x30] sm:$0xf]
      %v2091 = vld [vmem:[%s2081 + $0x34] sm:$0xf]
      %v2092 = vld [vmem:[%s2081 + $0x3c] sm:$0xf]
      %v2093 = vld [vmem:[%s2081 + $0x40] sm:$0xf]
      %v2094 = vld [vmem:[%s2081 + $0x48] sm:$0xf]
      %v2095 = vld [vmem:[%s2081 + $0x4c] sm:$0xf]
      %v2096 = vld [vmem:[%s2081 + $0x54] sm:$0xf]
      %v2097 = vld [vmem:[%s2081 + $0x58] sm:$0xf]
      %v2098 = vld [vmem:[#allocation2] sm:$0xff]
      %v2099 = vld [vmem:[#allocation2 + $0x8] sm:$0xff]
      %v2100 = vld [vmem:[#allocation2 + $0x10] sm:$0xff]
      %v2101 = vld [vmem:[#allocation2 + $0x18] sm:$0xff]
      %v2102 = vld [vmem:[#allocation2 + $0x20] sm:$0xff]
      %v2103 = vld [vmem:[#allocation2 + $0x28] sm:$0xff]
      %v2104 = vld [vmem:[#allocation2 + $0x30] sm:$0xff]
      %v2105 = vld [vmem:[#allocation2 + $0x38] sm:$0xff]
      %v2106 = vld [vmem:[#allocation2 + $0x40] sm:$0xff]
      %v2107 = vld [vmem:[#allocation2 + $0x48] sm:$0xff]
      %v2108 = vld [vmem:[#allocation2 + $0x50] sm:$0xff]
      %v2109 = vld [vmem:[#allocation2 + $0x58] sm:$0xff]
      %v2110 = vld [vmem:[#allocation2 + $0x60] sm:$0xff]
      %v2111 = vld [vmem:[#allocation2 + $0x68] sm:$0xff]
      %v2112 = vld [vmem:[#allocation2 + $0x70] sm:$0xff]
      %v2113 = vld [vmem:[#allocation2 + $0x78] sm:$0xff]
      %s2114 = scalar_lea.vmem %s2, 384
      %v2115 = vld [vmem:[%s2114] sm:$0xf]
      %v2116 = vld [vmem:[%s2114 + $0x4] sm:$0xf]
      %v2117 = vld [vmem:[%s2114 + $0x8] sm:$0xf]
      %v2118 = vld [vmem:[%s2114 + $0xc] sm:$0xf]
      %v2119 = vld [vmem:[%s2114 + $0x10] sm:$0xf]
      %v2120 = vld [vmem:[%s2114 + $0x14] sm:$0xf]
      %v2121 = vld [vmem:[%s2114 + $0x18] sm:$0xf]
      %v2122 = vld [vmem:[%s2114 + $0x1c] sm:$0xf]
      %v2123 = vld [vmem:[%s2114 + $0x20] sm:$0xf]
      %v2124 = vld [vmem:[%s2114 + $0x24] sm:$0xf]
      %v2125 = vld [vmem:[%s2114 + $0x28] sm:$0xf]
      %v2126 = vld [vmem:[%s2114 + $0x2c] sm:$0xf]
      %v2127 = vld [vmem:[%s2114 + $0x30] sm:$0xf]
      %v2128 = vld [vmem:[%s2114 + $0x34] sm:$0xf]
      %v2129 = vld [vmem:[%s2114 + $0x38] sm:$0xf]
      %v2130 = vld [vmem:[%s2114 + $0x3c] sm:$0xf]
      %v2147 = vunpack.c.l.b16 %v2082
      %v2148 = vunpack.c.l.b16 %v2083
      %v2149 = vunpack.c.l.b16 %v2084
      %v2150 = vunpack.c.l.b16 %v2085
      %v2151 = vunpack.c.l.b16 %v2086
      %v2152 = vunpack.c.l.b16 %v2087
      %v2153 = vunpack.c.l.b16 %v2088
      %v2154 = vunpack.c.l.b16 %v2089
      %v2155 = vunpack.c.l.b16 %v2090
      %v2156 = vunpack.c.l.b16 %v2091
      %v2157 = vunpack.c.l.b16 %v2092
      %v2158 = vunpack.c.l.b16 %v2093
      %v2159 = vunpack.c.l.b16 %v2094
      %v2160 = vunpack.c.l.b16 %v2095
      %v2161 = vunpack.c.l.b16 %v2096
      %v2162 = vunpack.c.l.b16 %v2097
      %v2163 = vpack.c.b16 %v2148, %v2147
      %v2164 = vpack.c.b16 %v2150, %v2149
      %v2165 = vpack.c.b16 %v2152, %v2151
      %v2166 = vpack.c.b16 %v2154, %v2153
      %v2167 = vpack.c.b16 %v2156, %v2155
      %v2168 = vpack.c.b16 %v2158, %v2157
      %v2169 = vpack.c.b16 %v2160, %v2159
      %v2170 = vpack.c.b16 %v2162, %v2161
      %v2195 = vunpack.c.l.b16 %v2115
      %v2196 = vunpack.c.l.b16 %v2116
      %v2197 = vunpack.c.l.b16 %v2117
      %v2198 = vunpack.c.l.b16 %v2118
      %v2199 = vunpack.c.l.b16 %v2119
      %v2200 = vunpack.c.l.b16 %v2120
      %v2201 = vunpack.c.l.b16 %v2121
      %v2202 = vunpack.c.l.b16 %v2122
      %v2203 = vunpack.c.l.b16 %v2123
      %v2204 = vunpack.c.l.b16 %v2124
      %v2205 = vunpack.c.l.b16 %v2125
      %v2206 = vunpack.c.l.b16 %v2126
      %v2207 = vunpack.c.l.b16 %v2127
      %v2208 = vunpack.c.l.b16 %v2128
      %v2209 = vunpack.c.l.b16 %v2129
      %v2210 = vunpack.c.l.b16 %v2130
      %v2211 = vpack.c.b16 %v2196, %v2195
      %v2212 = vpack.c.b16 %v2198, %v2197
      %v2213 = vpack.c.b16 %v2200, %v2199
      %v2214 = vpack.c.b16 %v2202, %v2201
      %v2215 = vpack.c.b16 %v2204, %v2203
      %v2216 = vpack.c.b16 %v2206, %v2205
      %v2217 = vpack.c.b16 %v2208, %v2207
      %v2218 = vpack.c.b16 %v2210, %v2209
      %2227 = vmatpush.bf16.msra.mxu0 %v2218
      %2228 = vmatpush.bf16.msra.mxu0 %v2217
      %2229 = vmatpush.bf16.msra.mxu0 %v2216
      %2230 = vmatpush.bf16.msra.mxu0 %v2215
      %2231 = vmatpush.bf16.msra.mxu0 %v2214
      %2232 = vmatpush.bf16.msra.mxu0 %v2213
      %2233 = vmatpush.bf16.msra.mxu0 %v2212
      %2234 = vmatpush.bf16.msra.mxu0 %v2211
      %2235 = vmatmul.bf16.gmra.mxu0 %v2163
      %v2236 = vpop.f32.mrf.mxu0
      %v2237 = vadd.f32 0.0, %v2236
      %v2238 = vpop.f32.mrf.mxu0
      %v2239 = vadd.f32 0.0, %v2238
      %2240 = vmatmul.bf16.gmra.mxu0 %v2164
      %v2241 = vpop.f32.mrf.mxu0
      %v2242 = vadd.f32 0.0, %v2241
      %v2243 = vpop.f32.mrf.mxu0
      %v2244 = vadd.f32 0.0, %v2243
      %2245 = vmatmul.bf16.gmra.mxu0 %v2165
      %v2246 = vpop.f32.mrf.mxu0
      %v2247 = vadd.f32 0.0, %v2246
      %v2248 = vpop.f32.mrf.mxu0
      %v2249 = vadd.f32 0.0, %v2248
      %2250 = vmatmul.bf16.gmra.mxu0 %v2166
      %v2251 = vpop.f32.mrf.mxu0
      %v2252 = vadd.f32 0.0, %v2251
      %v2253 = vpop.f32.mrf.mxu0
      %v2254 = vadd.f32 0.0, %v2253
      %2255 = vmatmul.bf16.gmra.mxu0 %v2167
      %v2256 = vpop.f32.mrf.mxu0
      %v2257 = vadd.f32 0.0, %v2256
      %v2258 = vpop.f32.mrf.mxu0
      %v2259 = vadd.f32 0.0, %v2258
      %2260 = vmatmul.bf16.gmra.mxu0 %v2168
      %v2261 = vpop.f32.mrf.mxu0
      %v2262 = vadd.f32 0.0, %v2261
      %v2263 = vpop.f32.mrf.mxu0
      %v2264 = vadd.f32 0.0, %v2263
      %2265 = vmatmul.bf16.gmra.mxu0 %v2169
      %v2266 = vpop.f32.mrf.mxu0
      %v2267 = vadd.f32 0.0, %v2266
      %v2268 = vpop.f32.mrf.mxu0
      %v2269 = vadd.f32 0.0, %v2268
      %2270 = vmatmul.bf16.gmra.mxu0 %v2170
      %v2271 = vpop.f32.mrf.mxu0
      %v2272 = vadd.f32 0.0, %v2271
      %v2273 = vpop.f32.mrf.mxu0
      %v2274 = vadd.f32 0.0, %v2273
      %2275 = vdwg.mxu0
      %v2276 = vadd.f32 %v2098, %v2237
      %v2277 = vadd.f32 %v2099, %v2239
      %v2278 = vadd.f32 %v2100, %v2242
      %v2279 = vadd.f32 %v2101, %v2244
      %v2280 = vadd.f32 %v2102, %v2247
      %v2281 = vadd.f32 %v2103, %v2249
      %v2282 = vadd.f32 %v2104, %v2252
      %v2283 = vadd.f32 %v2105, %v2254
      %v2284 = vadd.f32 %v2106, %v2257
      %v2285 = vadd.f32 %v2107, %v2259
      %v2286 = vadd.f32 %v2108, %v2262
      %v2287 = vadd.f32 %v2109, %v2264
      %v2288 = vadd.f32 %v2110, %v2267
      %v2289 = vadd.f32 %v2111, %v2269
      %v2290 = vadd.f32 %v2112, %v2272
      %v2291 = vadd.f32 %v2113, %v2274
      %2292 = vst [vmem:[#allocation2] sm:$0xff] %v2276
      %2293 = vst [vmem:[#allocation2 + $0x8] sm:$0xff] %v2277
      %2294 = vst [vmem:[#allocation2 + $0x10] sm:$0xff] %v2278
      %2295 = vst [vmem:[#allocation2 + $0x18] sm:$0xff] %v2279
      %2296 = vst [vmem:[#allocation2 + $0x20] sm:$0xff] %v2280
      %2297 = vst [vmem:[#allocation2 + $0x28] sm:$0xff] %v2281
      %2298 = vst [vmem:[#allocation2 + $0x30] sm:$0xff] %v2282
      %2299 = vst [vmem:[#allocation2 + $0x38] sm:$0xff] %v2283
      %2300 = vst [vmem:[#allocation2 + $0x40] sm:$0xff] %v2284
      %2301 = vst [vmem:[#allocation2 + $0x48] sm:$0xff] %v2285
      %2302 = vst [vmem:[#allocation2 + $0x50] sm:$0xff] %v2286
      %2303 = vst [vmem:[#allocation2 + $0x58] sm:$0xff] %v2287
      %2304 = vst [vmem:[#allocation2 + $0x60] sm:$0xff] %v2288
      %2305 = vst [vmem:[#allocation2 + $0x68] sm:$0xff] %v2289
      %2306 = vst [vmem:[#allocation2 + $0x70] sm:$0xff] %v2290
      %2307 = vst [vmem:[#allocation2 + $0x78] sm:$0xff] %v2291
      %v2308 = vld [vmem:[%s2081] sm:$0xf]
      %v2309 = vld [vmem:[%s2081 + $0x4] sm:$0xf]
      %v2310 = vld [vmem:[%s2081 + $0x8] sm:$0x1]
      %v2311 = vld [vmem:[%s2081 + $0xc] sm:$0xf]
      %v2312 = vld [vmem:[%s2081 + $0x10] sm:$0xf]
      %v2313 = vld [vmem:[%s2081 + $0x14] sm:$0x1]
      %v2314 = vld [vmem:[%s2081 + $0x18] sm:$0xf]
      %v2315 = vld [vmem:[%s2081 + $0x1c] sm:$0xf]
      %v2316 = vld [vmem:[%s2081 + $0x20] sm:$0x1]
      %v2317 = vld [vmem:[%s2081 + $0x24] sm:$0xf]
      %v2318 = vld [vmem:[%s2081 + $0x28] sm:$0xf]
      %v2319 = vld [vmem:[%s2081 + $0x2c] sm:$0x1]
      %v2320 = vld [vmem:[%s2081 + $0x30] sm:$0xf]
      %v2321 = vld [vmem:[%s2081 + $0x34] sm:$0xf]
      %v2322 = vld [vmem:[%s2081 + $0x38] sm:$0x1]
      %v2323 = vld [vmem:[%s2081 + $0x3c] sm:$0xf]
      %v2324 = vld [vmem:[%s2081 + $0x40] sm:$0xf]
      %v2325 = vld [vmem:[%s2081 + $0x44] sm:$0x1]
      %v2326 = vld [vmem:[%s2081 + $0x48] sm:$0xf]
      %v2327 = vld [vmem:[%s2081 + $0x4c] sm:$0xf]
      %v2328 = vld [vmem:[%s2081 + $0x50] sm:$0x1]
      %v2329 = vld [vmem:[%s2081 + $0x54] sm:$0xf]
      %v2330 = vld [vmem:[%s2081 + $0x58] sm:$0xf]
      %v2331 = vld [vmem:[%s2081 + $0x5c] sm:$0x1]
      %v2333 = vshrl.u32 %v2308, 16
      %v2335 = vrot.slane %v2333, 4
      %v2336 = vshll.u32 %v2308, 16
      %v2338 = vrot.slane %v2336, 5
      %v2339 = vor.u32 %v2335, %v2338
      %v2340 = vrot.slane %v2339, 4
      %v2342 = vshll.u32 %v2309, 16
      %v2344 = vrot.slane %v2342, 5
      %v2345 = vsel %vm458, %v2340, %v2344
      %v2346 = vshrl.u32 %v2309, 16
      %v2348 = vrot.slane %v2346, 4
      %v2349 = vor.u32 %v2348, %v2344
      %v2350 = vrot.slane %v2349, 4
      %v2352 = vshll.u32 %v2310, 16
      %v2354 = vrot.slane %v2352, 5
      %v2355 = vsel %vm458, %v2350, %v2354
      %v2357 = vshrl.u32 %v2311, 16
      %v2359 = vrot.slane %v2357, 4
      %v2360 = vshll.u32 %v2311, 16
      %v2362 = vrot.slane %v2360, 5
      %v2363 = vor.u32 %v2359, %v2362
      %v2364 = vrot.slane %v2363, 4
      %v2366 = vshll.u32 %v2312, 16
      %v2368 = vrot.slane %v2366, 5
      %v2369 = vsel %vm458, %v2364, %v2368
      %v2370 = vshrl.u32 %v2312, 16
      %v2372 = vrot.slane %v2370, 4
      %v2373 = vor.u32 %v2372, %v2368
      %v2374 = vrot.slane %v2373, 4
      %v2376 = vshll.u32 %v2313, 16
      %v2378 = vrot.slane %v2376, 5
      %v2379 = vsel %vm458, %v2374, %v2378
      %v2381 = vshrl.u32 %v2314, 16
      %v2383 = vrot.slane %v2381, 4
      %v2384 = vshll.u32 %v2314, 16
      %v2386 = vrot.slane %v2384, 5
      %v2387 = vor.u32 %v2383, %v2386
      %v2388 = vrot.slane %v2387, 4
      %v2390 = vshll.u32 %v2315, 16
      %v2392 = vrot.slane %v2390, 5
      %v2393 = vsel %vm458, %v2388, %v2392
      %v2394 = vshrl.u32 %v2315, 16
      %v2396 = vrot.slane %v2394, 4
      %v2397 = vor.u32 %v2396, %v2392
      %v2398 = vrot.slane %v2397, 4
      %v2400 = vshll.u32 %v2316, 16
      %v2402 = vrot.slane %v2400, 5
      %v2403 = vsel %vm458, %v2398, %v2402
      %v2405 = vshrl.u32 %v2317, 16
      %v2407 = vrot.slane %v2405, 4
      %v2408 = vshll.u32 %v2317, 16
      %v2410 = vrot.slane %v2408, 5
      %v2411 = vor.u32 %v2407, %v2410
      %v2412 = vrot.slane %v2411, 4
      %v2414 = vshll.u32 %v2318, 16
      %v2416 = vrot.slane %v2414, 5
      %v2417 = vsel %vm458, %v2412, %v2416
      %v2418 = vshrl.u32 %v2318, 16
      %v2420 = vrot.slane %v2418, 4
      %v2421 = vor.u32 %v2420, %v2416
      %v2422 = vrot.slane %v2421, 4
      %v2424 = vshll.u32 %v2319, 16
      %v2426 = vrot.slane %v2424, 5
      %v2427 = vsel %vm458, %v2422, %v2426
      %v2429 = vshrl.u32 %v2320, 16
      %v2431 = vrot.slane %v2429, 4
      %v2432 = vshll.u32 %v2320, 16
      %v2434 = vrot.slane %v2432, 5
      %v2435 = vor.u32 %v2431, %v2434
      %v2436 = vrot.slane %v2435, 4
      %v2438 = vshll.u32 %v2321, 16
      %v2440 = vrot.slane %v2438, 5
      %v2441 = vsel %vm458, %v2436, %v2440
      %v2442 = vshrl.u32 %v2321, 16
      %v2444 = vrot.slane %v2442, 4
      %v2445 = vor.u32 %v2444, %v2440
      %v2446 = vrot.slane %v2445, 4
      %v2448 = vshll.u32 %v2322, 16
      %v2450 = vrot.slane %v2448, 5
      %v2451 = vsel %vm458, %v2446, %v2450
      %v2453 = vshrl.u32 %v2323, 16
      %v2455 = vrot.slane %v2453, 4
      %v2456 = vshll.u32 %v2323, 16
      %v2458 = vrot.slane %v2456, 5
      %v2459 = vor.u32 %v2455, %v2458
      %v2460 = vrot.slane %v2459, 4
      %v2462 = vshll.u32 %v2324, 16
      %v2464 = vrot.slane %v2462, 5
      %v2465 = vsel %vm458, %v2460, %v2464
      %v2466 = vshrl.u32 %v2324, 16
      %v2468 = vrot.slane %v2466, 4
      %v2469 = vor.u32 %v2468, %v2464
      %v2470 = vrot.slane %v2469, 4
      %v2472 = vshll.u32 %v2325, 16
      %v2474 = vrot.slane %v2472, 5
      %v2475 = vsel %vm458, %v2470, %v2474
      %v2477 = vshrl.u32 %v2326, 16
      %v2479 = vrot.slane %v2477, 4
      %v2480 = vshll.u32 %v2326, 16
      %v2482 = vrot.slane %v2480, 5
      %v2483 = vor.u32 %v2479, %v2482
      %v2484 = vrot.slane %v2483, 4
      %v2486 = vshll.u32 %v2327, 16
      %v2488 = vrot.slane %v2486, 5
      %v2489 = vsel %vm458, %v2484, %v2488
      %v2490 = vshrl.u32 %v2327, 16
      %v2492 = vrot.slane %v2490, 4
      %v2493 = vor.u32 %v2492, %v2488
      %v2494 = vrot.slane %v2493, 4
      %v2496 = vshll.u32 %v2328, 16
      %v2498 = vrot.slane %v2496, 5
      %v2499 = vsel %vm458, %v2494, %v2498
      %v2501 = vshrl.u32 %v2329, 16
      %v2503 = vrot.slane %v2501, 4
      %v2504 = vshll.u32 %v2329, 16
      %v2506 = vrot.slane %v2504, 5
      %v2507 = vor.u32 %v2503, %v2506
      %v2508 = vrot.slane %v2507, 4
      %v2510 = vshll.u32 %v2330, 16
      %v2512 = vrot.slane %v2510, 5
      %v2513 = vsel %vm458, %v2508, %v2512
      %v2514 = vshrl.u32 %v2330, 16
      %v2516 = vrot.slane %v2514, 4
      %v2517 = vor.u32 %v2516, %v2512
      %v2518 = vrot.slane %v2517, 4
      %v2520 = vshll.u32 %v2331, 16
      %v2522 = vrot.slane %v2520, 5
      %v2523 = vsel %vm458, %v2518, %v2522
      %v2524 = vld [vmem:[#allocation2] sm:$0xff]
      %v2525 = vld [vmem:[#allocation2 + $0x8] sm:$0xff]
      %v2526 = vld [vmem:[#allocation2 + $0x10] sm:$0xff]
      %v2527 = vld [vmem:[#allocation2 + $0x18] sm:$0xff]
      %v2528 = vld [vmem:[#allocation2 + $0x20] sm:$0xff]
      %v2529 = vld [vmem:[#allocation2 + $0x28] sm:$0xff]
      %v2530 = vld [vmem:[#allocation2 + $0x30] sm:$0xff]
      %v2531 = vld [vmem:[#allocation2 + $0x38] sm:$0xff]
      %v2532 = vld [vmem:[#allocation2 + $0x40] sm:$0xff]
      %v2533 = vld [vmem:[#allocation2 + $0x48] sm:$0xff]
      %v2534 = vld [vmem:[#allocation2 + $0x50] sm:$0xff]
      %v2535 = vld [vmem:[#allocation2 + $0x58] sm:$0xff]
      %v2536 = vld [vmem:[#allocation2 + $0x60] sm:$0xff]
      %v2537 = vld [vmem:[#allocation2 + $0x68] sm:$0xff]
      %v2538 = vld [vmem:[#allocation2 + $0x70] sm:$0xff]
      %v2539 = vld [vmem:[#allocation2 + $0x78] sm:$0xff]
      %s2540 = scalar_lea.vmem %s2, 448
      %v2541 = vld [vmem:[%s2540] sm:$0xf]
      %v2542 = vld [vmem:[%s2540 + $0x4] sm:$0xf]
      %v2543 = vld [vmem:[%s2540 + $0x8] sm:$0xf]
      %v2544 = vld [vmem:[%s2540 + $0xc] sm:$0xf]
      %v2545 = vld [vmem:[%s2540 + $0x10] sm:$0xf]
      %v2546 = vld [vmem:[%s2540 + $0x14] sm:$0xf]
      %v2547 = vld [vmem:[%s2540 + $0x18] sm:$0xf]
      %v2548 = vld [vmem:[%s2540 + $0x1c] sm:$0xf]
      %v2549 = vld [vmem:[%s2540 + $0x20] sm:$0xf]
      %v2550 = vld [vmem:[%s2540 + $0x24] sm:$0xf]
      %v2551 = vld [vmem:[%s2540 + $0x28] sm:$0xf]
      %v2552 = vld [vmem:[%s2540 + $0x2c] sm:$0xf]
      %v2553 = vld [vmem:[%s2540 + $0x30] sm:$0xf]
      %v2554 = vld [vmem:[%s2540 + $0x34] sm:$0xf]
      %v2555 = vld [vmem:[%s2540 + $0x38] sm:$0xf]
      %v2556 = vld [vmem:[%s2540 + $0x3c] sm:$0xf]
      %v2557 = vunpack.c.l.b16 %v2345
      %v2558 = vunpack.c.l.b16 %v2355
      %v2559 = vunpack.c.l.b16 %v2369
      %v2560 = vunpack.c.l.b16 %v2379
      %v2561 = vunpack.c.l.b16 %v2393
      %v2562 = vunpack.c.l.b16 %v2403
      %v2563 = vunpack.c.l.b16 %v2417
      %v2564 = vunpack.c.l.b16 %v2427
      %v2565 = vunpack.c.l.b16 %v2441
      %v2566 = vunpack.c.l.b16 %v2451
      %v2567 = vunpack.c.l.b16 %v2465
      %v2568 = vunpack.c.l.b16 %v2475
      %v2569 = vunpack.c.l.b16 %v2489
      %v2570 = vunpack.c.l.b16 %v2499
      %v2571 = vunpack.c.l.b16 %v2513
      %v2572 = vunpack.c.l.b16 %v2523
      %v2573 = vpack.c.b16 %v2558, %v2557
      %v2574 = vpack.c.b16 %v2560, %v2559
      %v2575 = vpack.c.b16 %v2562, %v2561
      %v2576 = vpack.c.b16 %v2564, %v2563
      %v2577 = vpack.c.b16 %v2566, %v2565
      %v2578 = vpack.c.b16 %v2568, %v2567
      %v2579 = vpack.c.b16 %v2570, %v2569
      %v2580 = vpack.c.b16 %v2572, %v2571
      %v2605 = vunpack.c.l.b16 %v2541
      %v2606 = vunpack.c.l.b16 %v2542
      %v2607 = vunpack.c.l.b16 %v2543
      %v2608 = vunpack.c.l.b16 %v2544
      %v2609 = vunpack.c.l.b16 %v2545
      %v2610 = vunpack.c.l.b16 %v2546
      %v2611 = vunpack.c.l.b16 %v2547
      %v2612 = vunpack.c.l.b16 %v2548
      %v2613 = vunpack.c.l.b16 %v2549
      %v2614 = vunpack.c.l.b16 %v2550
      %v2615 = vunpack.c.l.b16 %v2551
      %v2616 = vunpack.c.l.b16 %v2552
      %v2617 = vunpack.c.l.b16 %v2553
      %v2618 = vunpack.c.l.b16 %v2554
      %v2619 = vunpack.c.l.b16 %v2555
      %v2620 = vunpack.c.l.b16 %v2556
      %v2621 = vpack.c.b16 %v2606, %v2605
      %v2622 = vpack.c.b16 %v2608, %v2607
      %v2623 = vpack.c.b16 %v2610, %v2609
      %v2624 = vpack.c.b16 %v2612, %v2611
      %v2625 = vpack.c.b16 %v2614, %v2613
      %v2626 = vpack.c.b16 %v2616, %v2615
      %v2627 = vpack.c.b16 %v2618, %v2617
      %v2628 = vpack.c.b16 %v2620, %v2619
      %2637 = vmatpush.bf16.msra.mxu0 %v2628
      %2638 = vmatpush.bf16.msra.mxu0 %v2627
      %2639 = vmatpush.bf16.msra.mxu0 %v2626
      %2640 = vmatpush.bf16.msra.mxu0 %v2625
      %2641 = vmatpush.bf16.msra.mxu0 %v2624
      %2642 = vmatpush.bf16.msra.mxu0 %v2623
      %2643 = vmatpush.bf16.msra.mxu0 %v2622
      %2644 = vmatpush.bf16.msra.mxu0 %v2621
      %2645 = vmatmul.bf16.gmra.mxu0 %v2573
      %v2646 = vpop.f32.mrf.mxu0
      %v2647 = vadd.f32 0.0, %v2646
      %v2648 = vpop.f32.mrf.mxu0
      %v2649 = vadd.f32 0.0, %v2648
      %2650 = vmatmul.bf16.gmra.mxu0 %v2574
      %v2651 = vpop.f32.mrf.mxu0
      %v2652 = vadd.f32 0.0, %v2651
      %v2653 = vpop.f32.mrf.mxu0
      %v2654 = vadd.f32 0.0, %v2653
      %2655 = vmatmul.bf16.gmra.mxu0 %v2575
      %v2656 = vpop.f32.mrf.mxu0
      %v2657 = vadd.f32 0.0, %v2656
      %v2658 = vpop.f32.mrf.mxu0
      %v2659 = vadd.f32 0.0, %v2658
      %2660 = vmatmul.bf16.gmra.mxu0 %v2576
      %v2661 = vpop.f32.mrf.mxu0
      %v2662 = vadd.f32 0.0, %v2661
      %v2663 = vpop.f32.mrf.mxu0
      %v2664 = vadd.f32 0.0, %v2663
      %2665 = vmatmul.bf16.gmra.mxu0 %v2577
      %v2666 = vpop.f32.mrf.mxu0
      %v2667 = vadd.f32 0.0, %v2666
      %v2668 = vpop.f32.mrf.mxu0
      %v2669 = vadd.f32 0.0, %v2668
      %2670 = vmatmul.bf16.gmra.mxu0 %v2578
      %v2671 = vpop.f32.mrf.mxu0
      %v2672 = vadd.f32 0.0, %v2671
      %v2673 = vpop.f32.mrf.mxu0
      %v2674 = vadd.f32 0.0, %v2673
      %2675 = vmatmul.bf16.gmra.mxu0 %v2579
      %v2676 = vpop.f32.mrf.mxu0
      %v2677 = vadd.f32 0.0, %v2676
      %v2678 = vpop.f32.mrf.mxu0
      %v2679 = vadd.f32 0.0, %v2678
      %2680 = vmatmul.bf16.gmra.mxu0 %v2580
      %v2681 = vpop.f32.mrf.mxu0
      %v2682 = vadd.f32 0.0, %v2681
      %v2683 = vpop.f32.mrf.mxu0
      %v2684 = vadd.f32 0.0, %v2683
      %2685 = vdwg.mxu0
      %v2686 = vadd.f32 %v2524, %v2647
      %v2687 = vadd.f32 %v2525, %v2649
      %v2688 = vadd.f32 %v2526, %v2652
      %v2689 = vadd.f32 %v2527, %v2654
      %v2690 = vadd.f32 %v2528, %v2657
      %v2691 = vadd.f32 %v2529, %v2659
      %v2692 = vadd.f32 %v2530, %v2662
      %v2693 = vadd.f32 %v2531, %v2664
      %v2694 = vadd.f32 %v2532, %v2667
      %v2695 = vadd.f32 %v2533, %v2669
      %v2696 = vadd.f32 %v2534, %v2672
      %v2697 = vadd.f32 %v2535, %v2674
      %v2698 = vadd.f32 %v2536, %v2677
      %v2699 = vadd.f32 %v2537, %v2679
      %v2700 = vadd.f32 %v2538, %v2682
      %v2701 = vadd.f32 %v2539, %v2684
      %2702 = vst [vmem:[#allocation2] sm:$0xff] %v2686
      %2703 = vst [vmem:[#allocation2 + $0x8] sm:$0xff] %v2687
      %2704 = vst [vmem:[#allocation2 + $0x10] sm:$0xff] %v2688
      %2705 = vst [vmem:[#allocation2 + $0x18] sm:$0xff] %v2689
      %2706 = vst [vmem:[#allocation2 + $0x20] sm:$0xff] %v2690
      %2707 = vst [vmem:[#allocation2 + $0x28] sm:$0xff] %v2691
      %2708 = vst [vmem:[#allocation2 + $0x30] sm:$0xff] %v2692
      %2709 = vst [vmem:[#allocation2 + $0x38] sm:$0xff] %v2693
      %2710 = vst [vmem:[#allocation2 + $0x40] sm:$0xff] %v2694
      %2711 = vst [vmem:[#allocation2 + $0x48] sm:$0xff] %v2695
      %2712 = vst [vmem:[#allocation2 + $0x50] sm:$0xff] %v2696
      %2713 = vst [vmem:[#allocation2 + $0x58] sm:$0xff] %v2697
      %2714 = vst [vmem:[#allocation2 + $0x60] sm:$0xff] %v2698
      %2715 = vst [vmem:[#allocation2 + $0x68] sm:$0xff] %v2699
      %2716 = vst [vmem:[#allocation2 + $0x70] sm:$0xff] %v2700
      %2717 = vst [vmem:[#allocation2 + $0x78] sm:$0xff] %v2701
      %v2718 = vld [vmem:[%s2081] sm:$0xe]
      %v2719 = vld [vmem:[%s2081 + $0x4] sm:$0xf]
      %v2720 = vld [vmem:[%s2081 + $0x8] sm:$0x1]
      %v2721 = vld [vmem:[%s2081 + $0xc] sm:$0xe]
      %v2722 = vld [vmem:[%s2081 + $0x10] sm:$0xf]
      %v2723 = vld [vmem:[%s2081 + $0x14] sm:$0x1]
      %v2724 = vld [vmem:[%s2081 + $0x18] sm:$0xe]
      %v2725 = vld [vmem:[%s2081 + $0x1c] sm:$0xf]
      %v2726 = vld [vmem:[%s2081 + $0x20] sm:$0x1]
      %v2727 = vld [vmem:[%s2081 + $0x24] sm:$0xe]
      %v2728 = vld [vmem:[%s2081 + $0x28] sm:$0xf]
      %v2729 = vld [vmem:[%s2081 + $0x2c] sm:$0x1]
      %v2730 = vld [vmem:[%s2081 + $0x30] sm:$0xe]
      %v2731 = vld [vmem:[%s2081 + $0x34] sm:$0xf]
      %v2732 = vld [vmem:[%s2081 + $0x38] sm:$0x1]
      %v2733 = vld [vmem:[%s2081 + $0x3c] sm:$0xe]
      %v2734 = vld [vmem:[%s2081 + $0x40] sm:$0xf]
      %v2735 = vld [vmem:[%s2081 + $0x44] sm:$0x1]
      %v2736 = vld [vmem:[%s2081 + $0x48] sm:$0xe]
      %v2737 = vld [vmem:[%s2081 + $0x4c] sm:$0xf]
      %v2738 = vld [vmem:[%s2081 + $0x50] sm:$0x1]
      %v2739 = vld [vmem:[%s2081 + $0x54] sm:$0xe]
      %v2740 = vld [vmem:[%s2081 + $0x58] sm:$0xf]
      %v2741 = vld [vmem:[%s2081 + $0x5c] sm:$0x1]
      %v2766 = vrot.slane %v2718, 5
      %v2767 = vrot.slane %v2766, 4
      %v2768 = vrot.slane %v2719, 5
      %v2769 = vsel %vm895, %v2767, %v2768
      %v2770 = vrot.slane %v2768, 4
      %v2771 = vrot.slane %v2720, 5
      %v2772 = vsel %vm895, %v2770, %v2771
      %v2773 = vrot.slane %v2721, 5
      %v2774 = vrot.slane %v2773, 4
      %v2775 = vrot.slane %v2722, 5
      %v2776 = vsel %vm895, %v2774, %v2775
      %v2777 = vrot.slane %v2775, 4
      %v2778 = vrot.slane %v2723, 5
      %v2779 = vsel %vm895, %v2777, %v2778
      %v2780 = vrot.slane %v2724, 5
      %v2781 = vrot.slane %v2780, 4
      %v2782 = vrot.slane %v2725, 5
      %v2783 = vsel %vm895, %v2781, %v2782
      %v2784 = vrot.slane %v2782, 4
      %v2785 = vrot.slane %v2726, 5
      %v2786 = vsel %vm895, %v2784, %v2785
      %v2787 = vrot.slane %v2727, 5
      %v2788 = vrot.slane %v2787, 4
      %v2789 = vrot.slane %v2728, 5
      %v2790 = vsel %vm895, %v2788, %v2789
      %v2791 = vrot.slane %v2789, 4
      %v2792 = vrot.slane %v2729, 5
      %v2793 = vsel %vm895, %v2791, %v2792
      %v2794 = vrot.slane %v2730, 5
      %v2795 = vrot.slane %v2794, 4
      %v2796 = vrot.slane %v2731, 5
      %v2797 = vsel %vm895, %v2795, %v2796
      %v2798 = vrot.slane %v2796, 4
      %v2799 = vrot.slane %v2732, 5
      %v2800 = vsel %vm895, %v2798, %v2799
      %v2801 = vrot.slane %v2733, 5
      %v2802 = vrot.slane %v2801, 4
      %v2803 = vrot.slane %v2734, 5
      %v2804 = vsel %vm895, %v2802, %v2803
      %v2805 = vrot.slane %v2803, 4
      %v2806 = vrot.slane %v2735, 5
      %v2807 = vsel %vm895, %v2805, %v2806
      %v2808 = vrot.slane %v2736, 5
      %v2809 = vrot.slane %v2808, 4
      %v2810 = vrot.slane %v2737, 5
      %v2811 = vsel %vm895, %v2809, %v2810
      %v2812 = vrot.slane %v2810, 4
      %v2813 = vrot.slane %v2738, 5
      %v2814 = vsel %vm895, %v2812, %v2813
      %v2815 = vrot.slane %v2739, 5
      %v2816 = vrot.slane %v2815, 4
      %v2817 = vrot.slane %v2740, 5
      %v2818 = vsel %vm895, %v2816, %v2817
      %v2819 = vrot.slane %v2817, 4
      %v2820 = vrot.slane %v2741, 5
      %v2821 = vsel %vm895, %v2819, %v2820
      %v2822 = vld [vmem:[#allocation2] sm:$0xff]
      %v2823 = vld [vmem:[#allocation2 + $0x8] sm:$0xff]
      %v2824 = vld [vmem:[#allocation2 + $0x10] sm:$0xff]
      %v2825 = vld [vmem:[#allocation2 + $0x18] sm:$0xff]
      %v2826 = vld [vmem:[#allocation2 + $0x20] sm:$0xff]
      %v2827 = vld [vmem:[#allocation2 + $0x28] sm:$0xff]
      %v2828 = vld [vmem:[#allocation2 + $0x30] sm:$0xff]
      %v2829 = vld [vmem:[#allocation2 + $0x38] sm:$0xff]
      %v2830 = vld [vmem:[#allocation2 + $0x40] sm:$0xff]
      %v2831 = vld [vmem:[#allocation2 + $0x48] sm:$0xff]
      %v2832 = vld [vmem:[#allocation2 + $0x50] sm:$0xff]
      %v2833 = vld [vmem:[#allocation2 + $0x58] sm:$0xff]
      %v2834 = vld [vmem:[#allocation2 + $0x60] sm:$0xff]
      %v2835 = vld [vmem:[#allocation2 + $0x68] sm:$0xff]
      %v2836 = vld [vmem:[#allocation2 + $0x70] sm:$0xff]
      %v2837 = vld [vmem:[#allocation2 + $0x78] sm:$0xff]
      %s2838 = scalar_lea.vmem %s2, 512
      %v2839 = vld [vmem:[%s2838] sm:$0xf]
      %v2840 = vld [vmem:[%s2838 + $0x4] sm:$0xf]
      %v2841 = vld [vmem:[%s2838 + $0x8] sm:$0xf]
      %v2842 = vld [vmem:[%s2838 + $0xc] sm:$0xf]
      %v2843 = vld [vmem:[%s2838 + $0x10] sm:$0xf]
      %v2844 = vld [vmem:[%s2838 + $0x14] sm:$0xf]
      %v2845 = vld [vmem:[%s2838 + $0x18] sm:$0xf]
      %v2846 = vld [vmem:[%s2838 + $0x1c] sm:$0xf]
      %v2847 = vld [vmem:[%s2838 + $0x20] sm:$0xf]
      %v2848 = vld [vmem:[%s2838 + $0x24] sm:$0xf]
      %v2849 = vld [vmem:[%s2838 + $0x28] sm:$0xf]
      %v2850 = vld [vmem:[%s2838 + $0x2c] sm:$0xf]
      %v2851 = vld [vmem:[%s2838 + $0x30] sm:$0xf]
      %v2852 = vld [vmem:[%s2838 + $0x34] sm:$0xf]
      %v2853 = vld [vmem:[%s2838 + $0x38] sm:$0xf]
      %v2854 = vld [vmem:[%s2838 + $0x3c] sm:$0xf]
      %v2855 = vunpack.c.l.b16 %v2769
      %v2856 = vunpack.c.l.b16 %v2772
      %v2857 = vunpack.c.l.b16 %v2776
      %v2858 = vunpack.c.l.b16 %v2779
      %v2859 = vunpack.c.l.b16 %v2783
      %v2860 = vunpack.c.l.b16 %v2786
      %v2861 = vunpack.c.l.b16 %v2790
      %v2862 = vunpack.c.l.b16 %v2793
      %v2863 = vunpack.c.l.b16 %v2797
      %v2864 = vunpack.c.l.b16 %v2800
      %v2865 = vunpack.c.l.b16 %v2804
      %v2866 = vunpack.c.l.b16 %v2807
      %v2867 = vunpack.c.l.b16 %v2811
      %v2868 = vunpack.c.l.b16 %v2814
      %v2869 = vunpack.c.l.b16 %v2818
      %v2870 = vunpack.c.l.b16 %v2821
      %v2871 = vpack.c.b16 %v2856, %v2855
      %v2872 = vpack.c.b16 %v2858, %v2857
      %v2873 = vpack.c.b16 %v2860, %v2859
      %v2874 = vpack.c.b16 %v2862, %v2861
      %v2875 = vpack.c.b16 %v2864, %v2863
      %v2876 = vpack.c.b16 %v2866, %v2865
      %v2877 = vpack.c.b16 %v2868, %v2867
      %v2878 = vpack.c.b16 %v2870, %v2869
      %v2903 = vunpack.c.l.b16 %v2839
      %v2904 = vunpack.c.l.b16 %v2840
      %v2905 = vunpack.c.l.b16 %v2841
      %v2906 = vunpack.c.l.b16 %v2842
      %v2907 = vunpack.c.l.b16 %v2843
      %v2908 = vunpack.c.l.b16 %v2844
      %v2909 = vunpack.c.l.b16 %v2845
      %v2910 = vunpack.c.l.b16 %v2846
      %v2911 = vunpack.c.l.b16 %v2847
      %v2912 = vunpack.c.l.b16 %v2848
      %v2913 = vunpack.c.l.b16 %v2849
      %v2914 = vunpack.c.l.b16 %v2850
      %v2915 = vunpack.c.l.b16 %v2851
      %v2916 = vunpack.c.l.b16 %v2852
      %v2917 = vunpack.c.l.b16 %v2853
      %v2918 = vunpack.c.l.b16 %v2854
      %v2919 = vpack.c.b16 %v2904, %v2903
      %v2920 = vpack.c.b16 %v2906, %v2905
      %v2921 = vpack.c.b16 %v2908, %v2907
      %v2922 = vpack.c.b16 %v2910, %v2909
      %v2923 = vpack.c.b16 %v2912, %v2911
      %v2924 = vpack.c.b16 %v2914, %v2913
      %v2925 = vpack.c.b16 %v2916, %v2915
      %v2926 = vpack.c.b16 %v2918, %v2917
      %2935 = vmatpush.bf16.msra.mxu0 %v2926
      %2936 = vmatpush.bf16.msra.mxu0 %v2925
      %2937 = vmatpush.bf16.msra.mxu0 %v2924
      %2938 = vmatpush.bf16.msra.mxu0 %v2923
      %2939 = vmatpush.bf16.msra.mxu0 %v2922
      %2940 = vmatpush.bf16.msra.mxu0 %v2921
      %2941 = vmatpush.bf16.msra.mxu0 %v2920
      %2942 = vmatpush.bf16.msra.mxu0 %v2919
      %2943 = vmatmul.bf16.gmra.mxu0 %v2871
      %v2944 = vpop.f32.mrf.mxu0
      %v2945 = vadd.f32 0.0, %v2944
      %v2946 = vpop.f32.mrf.mxu0
      %v2947 = vadd.f32 0.0, %v2946
      %2948 = vmatmul.bf16.gmra.mxu0 %v2872
      %v2949 = vpop.f32.mrf.mxu0
      %v2950 = vadd.f32 0.0, %v2949
      %v2951 = vpop.f32.mrf.mxu0
      %v2952 = vadd.f32 0.0, %v2951
      %2953 = vmatmul.bf16.gmra.mxu0 %v2873
      %v2954 = vpop.f32.mrf.mxu0
      %v2955 = vadd.f32 0.0, %v2954
      %v2956 = vpop.f32.mrf.mxu0
      %v2957 = vadd.f32 0.0, %v2956
      %2958 = vmatmul.bf16.gmra.mxu0 %v2874
      %v2959 = vpop.f32.mrf.mxu0
      %v2960 = vadd.f32 0.0, %v2959
      %v2961 = vpop.f32.mrf.mxu0
      %v2962 = vadd.f32 0.0, %v2961
      %2963 = vmatmul.bf16.gmra.mxu0 %v2875
      %v2964 = vpop.f32.mrf.mxu0
      %v2965 = vadd.f32 0.0, %v2964
      %v2966 = vpop.f32.mrf.mxu0
      %v2967 = vadd.f32 0.0, %v2966
      %2968 = vmatmul.bf16.gmra.mxu0 %v2876
      %v2969 = vpop.f32.mrf.mxu0
      %v2970 = vadd.f32 0.0, %v2969
      %v2971 = vpop.f32.mrf.mxu0
      %v2972 = vadd.f32 0.0, %v2971
      %2973 = vmatmul.bf16.gmra.mxu0 %v2877
      %v2974 = vpop.f32.mrf.mxu0
      %v2975 = vadd.f32 0.0, %v2974
      %v2976 = vpop.f32.mrf.mxu0
      %v2977 = vadd.f32 0.0, %v2976
      %2978 = vmatmul.bf16.gmra.mxu0 %v2878
      %v2979 = vpop.f32.mrf.mxu0
      %v2980 = vadd.f32 0.0, %v2979
      %v2981 = vpop.f32.mrf.mxu0
      %v2982 = vadd.f32 0.0, %v2981
      %2983 = vdwg.mxu0
      %v2984 = vadd.f32 %v2822, %v2945
      %v2985 = vadd.f32 %v2823, %v2947
      %v2986 = vadd.f32 %v2824, %v2950
      %v2987 = vadd.f32 %v2825, %v2952
      %v2988 = vadd.f32 %v2826, %v2955
      %v2989 = vadd.f32 %v2827, %v2957
      %v2990 = vadd.f32 %v2828, %v2960
      %v2991 = vadd.f32 %v2829, %v2962
      %v2992 = vadd.f32 %v2830, %v2965
      %v2993 = vadd.f32 %v2831, %v2967
      %v2994 = vadd.f32 %v2832, %v2970
      %v2995 = vadd.f32 %v2833, %v2972
      %v2996 = vadd.f32 %v2834, %v2975
      %v2997 = vadd.f32 %v2835, %v2977
      %v2998 = vadd.f32 %v2836, %v2980
      %v2999 = vadd.f32 %v2837, %v2982
      %3000 = vst [vmem:[#allocation2] sm:$0xff] %v2984
      %3001 = vst [vmem:[#allocation2 + $0x8] sm:$0xff] %v2985
      %3002 = vst [vmem:[#allocation2 + $0x10] sm:$0xff] %v2986
      %3003 = vst [vmem:[#allocation2 + $0x18] sm:$0xff] %v2987
      %3004 = vst [vmem:[#allocation2 + $0x20] sm:$0xff] %v2988
      %3005 = vst [vmem:[#allocation2 + $0x28] sm:$0xff] %v2989
      %3006 = vst [vmem:[#allocation2 + $0x30] sm:$0xff] %v2990
      %3007 = vst [vmem:[#allocation2 + $0x38] sm:$0xff] %v2991
      %3008 = vst [vmem:[#allocation2 + $0x40] sm:$0xff] %v2992
      %3009 = vst [vmem:[#allocation2 + $0x48] sm:$0xff] %v2993
      %3010 = vst [vmem:[#allocation2 + $0x50] sm:$0xff] %v2994
      %3011 = vst [vmem:[#allocation2 + $0x58] sm:$0xff] %v2995
      %3012 = vst [vmem:[#allocation2 + $0x60] sm:$0xff] %v2996
      %3013 = vst [vmem:[#allocation2 + $0x68] sm:$0xff] %v2997
      %3014 = vst [vmem:[#allocation2 + $0x70] sm:$0xff] %v2998
      %3015 = vst [vmem:[#allocation2 + $0x78] sm:$0xff] %v2999
      %v3016 = vld [vmem:[#allocation2] sm:$0xff]
      %v3017 = vld [vmem:[#allocation2 + $0x8] sm:$0xff]
      %v3018 = vld [vmem:[#allocation2 + $0x10] sm:$0xff]
      %v3019 = vld [vmem:[#allocation2 + $0x18] sm:$0xff]
      %v3020 = vld [vmem:[#allocation2 + $0x20] sm:$0xff]
      %v3021 = vld [vmem:[#allocation2 + $0x28] sm:$0xff]
      %v3022 = vld [vmem:[#allocation2 + $0x30] sm:$0xff]
      %v3023 = vld [vmem:[#allocation2 + $0x38] sm:$0xff]
      %v3024 = vld [vmem:[#allocation2 + $0x40] sm:$0xff]
      %v3025 = vld [vmem:[#allocation2 + $0x48] sm:$0xff]
      %v3026 = vld [vmem:[#allocation2 + $0x50] sm:$0xff]
      %v3027 = vld [vmem:[#allocation2 + $0x58] sm:$0xff]
      %v3028 = vld [vmem:[#allocation2 + $0x60] sm:$0xff]
      %v3029 = vld [vmem:[#allocation2 + $0x68] sm:$0xff]
      %v3030 = vld [vmem:[#allocation2 + $0x70] sm:$0xff]
      %v3031 = vld [vmem:[#allocation2 + $0x78] sm:$0xff]
      %v3032 = vmax.f32 %v3016, 0.0
      %v3033 = vmax.f32 %v3017, 0.0
      %v3034 = vmax.f32 %v3018, 0.0
      %v3035 = vmax.f32 %v3019, 0.0
      %v3036 = vmax.f32 %v3020, 0.0
      %v3037 = vmax.f32 %v3021, 0.0
      %v3038 = vmax.f32 %v3022, 0.0
      %v3039 = vmax.f32 %v3023, 0.0
      %v3040 = vmax.f32 %v3024, 0.0
      %v3041 = vmax.f32 %v3025, 0.0
      %v3042 = vmax.f32 %v3026, 0.0
      %v3043 = vmax.f32 %v3027, 0.0
      %v3044 = vmax.f32 %v3028, 0.0
      %v3045 = vmax.f32 %v3029, 0.0
      %v3046 = vmax.f32 %v3030, 0.0
      %v3047 = vmax.f32 %v3031, 0.0
      %v3048 = vld [vmem:[%s185] sm:$0xff]
      %v3049 = vld [vmem:[%s185 + $0x8] sm:$0xff]
      %v3050 = vld [vmem:[%s185 + $0x10] sm:$0xff]
      %v3051 = vld [vmem:[%s185 + $0x18] sm:$0xff]
      %v3052 = vld [vmem:[%s185 + $0x20] sm:$0xff]
      %v3053 = vld [vmem:[%s185 + $0x28] sm:$0xff]
      %v3054 = vld [vmem:[%s185 + $0x30] sm:$0xff]
      %v3055 = vld [vmem:[%s185 + $0x38] sm:$0xff]
      %v3056 = vld [vmem:[%s185 + $0x40] sm:$0xff]
      %v3057 = vld [vmem:[%s185 + $0x48] sm:$0xff]
      %v3058 = vld [vmem:[%s185 + $0x50] sm:$0xff]
      %v3059 = vld [vmem:[%s185 + $0x58] sm:$0xff]
      %v3060 = vld [vmem:[%s185 + $0x60] sm:$0xff]
      %v3061 = vld [vmem:[%s185 + $0x68] sm:$0xff]
      %v3062 = vld [vmem:[%s185 + $0x70] sm:$0xff]
      %v3063 = vld [vmem:[%s185 + $0x78] sm:$0xff]
      %v3064 = vadd.f32 %v3032, %v3048
      %v3065 = vadd.f32 %v3033, %v3049
      %v3066 = vadd.f32 %v3034, %v3050
      %v3067 = vadd.f32 %v3035, %v3051
      %v3068 = vadd.f32 %v3036, %v3052
      %v3069 = vadd.f32 %v3037, %v3053
      %v3070 = vadd.f32 %v3038, %v3054
      %v3071 = vadd.f32 %v3039, %v3055
      %v3072 = vadd.f32 %v3040, %v3056
      %v3073 = vadd.f32 %v3041, %v3057
      %v3074 = vadd.f32 %v3042, %v3058
      %v3075 = vadd.f32 %v3043, %v3059
      %v3076 = vadd.f32 %v3044, %v3060
      %v3077 = vadd.f32 %v3045, %v3061
      %v3078 = vadd.f32 %v3046, %v3062
      %v3079 = vadd.f32 %v3047, %v3063
      %3080 = vst [vmem:[%s190] sm:$0xff] %v3064
      %3081 = vst [vmem:[%s190 + $0x8] sm:$0xff] %v3065
      %3082 = vst [vmem:[%s190 + $0x10] sm:$0xff] %v3066
      %3083 = vst [vmem:[%s190 + $0x18] sm:$0xff] %v3067
      %3084 = vst [vmem:[%s190 + $0x20] sm:$0xff] %v3068
      %3085 = vst [vmem:[%s190 + $0x28] sm:$0xff] %v3069
      %3086 = vst [vmem:[%s190 + $0x30] sm:$0xff] %v3070
      %3087 = vst [vmem:[%s190 + $0x38] sm:$0xff] %v3071
      %3088 = vst [vmem:[%s190 + $0x40] sm:$0xff] %v3072
      %3089 = vst [vmem:[%s190 + $0x48] sm:$0xff] %v3073
      %3090 = vst [vmem:[%s190 + $0x50] sm:$0xff] %v3074
      %3091 = vst [vmem:[%s190 + $0x58] sm:$0xff] %v3075
      %3092 = vst [vmem:[%s190 + $0x60] sm:$0xff] %v3076
      %3093 = vst [vmem:[%s190 + $0x68] sm:$0xff] %v3077
      %3094 = vst [vmem:[%s190 + $0x70] sm:$0xff] %v3078
      %3095 = vst [vmem:[%s190 + $0x78] sm:$0xff] %v3079
      %p3096 = scmp.lt.s32.totalorder %s14, 1
      %s3097 = scalar_select %p3096, %s14, 1
      %s3098 = smul.addr %s3097, 16
      %s3099 = smul.addr %s3098, 8
      %s3100 = scalar_lea.vmem %s3, %s3099
      // Predicated region
      $region33: #{_basic_conv3d_call.1} parent=31 // pred_check
        %p3101 = pneg %p105
      $region34: #{_basic_conv3d_call.1} parent=31 // pred_check_branch
        %3103 = sbr.rel (%p3101) target = $region36
      $region35: #{_basic_conv3d_call.1} parent=31 // pred_region
        _
      $region36: #{_basic_conv3d_call.1} parent=31 // pred_fallthru
        _
    $region32: #{_basic_conv3d_call.1} parent=5 // pred_fallthru
      _
    %p3104 = scmp.le.s32.totalorder 2, %s9
    // Predicated region
    $region37: #{_basic_conv3d_call.1} parent=5 // pred_check
      %p3105 = pneg %p3104
    $region38: #{_basic_conv3d_call.1} parent=5 // pred_check_branch
      %3107 = sbr.rel (%p3105) target = $region40
    $region39: #{_basic_conv3d_call.1} parent=5 // pred_region
      %s3108 = ssub.s32 %s9, 2
      // Predicated region
      $region41: #{_basic_conv3d_call.1} parent=39 // pred_check
        %p3109 = pneg %p111
      $region42: #{_basic_conv3d_call.1} parent=39 // pred_check_branch
        %3111 = sbr.rel (%p3109) target = $region44
      $region43: #{_basic_conv3d_call.1} parent=39 // pred_region
        %p3112 = scmp.lt.s32.totalorder %s15, 1
        %s3113 = scalar_select %p3112, %s15, 1
        %s3114 = smul.addr %s3113, 16
        %s3115 = smul.addr %s3114, 8
        %s3116 = scalar_lea.vmem %s3, %s3115
      $region44: #{_basic_conv3d_call.1} parent=39 // pred_fallthru
        _
    $region40: #{_basic_conv3d_call.1} parent=5 // pred_fallthru
      _
  $region6: #{_basic_conv3d_call.1} parent=0 // loop_footer
    %s13 = sadd.s32 1, %s9
  $region7: #{_basic_conv3d_call.1} parent=0 // loop_footer_branch
    %8 = sbr.rel target = $region3
  $region8: #{_basic_conv3d_call.1} parent=0 // loop_exit
    _

</llo_original>
